<compile_context>
chip_gen: v7x
topology: tpu7x:2x2x1
jax: 0.10.0
libtpu: 0.0.40
codegen_flags: <defaults>
</compile_context>

<pallas_src>
import math

import jax
import jax.numpy as jnp
from jax.experimental import pallas as pl
from jax.experimental.pallas import tpu as pltpu


def _round_up(n, m):
    return ((n + m - 1) // m) * m


# ----------------------------- fused Pallas kernel -----------------------------

def _fused_gcn_kernel(x_ref, z_ref, adjv_ref, adje_ref, t_ref,
                      w1_ref, p1_ref, b1_ref,
                      w2_ref, p2_ref, b2_ref,
                      w3_ref, p3_ref, b3_ref,
                      out_ref):
    f32 = jnp.float32
    _, nv, _ = x_ref.shape
    ne = z_ref.shape[1]

    def eye_mask(n):
        # Identity mask generated in-kernel (iota), no HBM traffic / DMA buffers.
        r = jax.lax.broadcasted_iota(jnp.int32, (n, n), 0)
        c = jax.lax.broadcasted_iota(jnp.int32, (n, n), 1)
        return r == c

    def proj(h, w_ref2):
        # Shared-weight projection flattened to ONE 2-D MXU matmul:
        # (bt*N, Fin) @ (Fin, Fout).  M = bt*N rows -> near-full systolic height.
        b_, n_, f_ = h.shape
        w = w_ref2[...]
        y = jnp.dot(h.reshape(b_ * n_, f_), w, preferred_element_type=f32)
        return y.reshape(b_, n_, w.shape[1])

    def bdot(a, b, contract):
        # Batched matmul; transposes are expressed via contracting dims so no
        # explicit T^T operand is ever materialized.
        return jax.lax.dot_general(
            a, b, dimension_numbers=(contract, ((0,), (0,))),
            preferred_element_type=f32)

    eyev = eye_mask(nv)                                          # [Nv, Nv] bool
    eyee = eye_mask(ne)                                          # [Ne, Ne] bool
    t = t_ref[...]                                               # reused by all 3 layers

    # ---------------- gc1 : node layer ----------------
    # per-edge scale s1 = H_e @ p1^T ; mult1 = T @ diag(s1) @ T^T
    z = z_ref[...]
    adjv = adjv_ref[...]                                         # reused by gc3
    s1 = jnp.sum(z * p1_ref[...], axis=2)[:, None, :]            # [bt, 1, Ne]
    mult1 = bdot(t * s1, t, ((2,), (2,)))                        # [bt, Nv, Nv]
    adj1 = adjv * jnp.where(eyev, 1.0, mult1)
    x1 = jnp.maximum(
        bdot(adj1, proj(x_ref[...], w1_ref), ((2,), (1,))) + b1_ref[...], 0.0)

    # ---------------- gc2 : edge layer ----------------
    # per-node scale s2 = X1 @ p2^T ; mult2 = T^T @ diag(s2) @ T
    s2 = jnp.sum(x1 * p2_ref[...], axis=2)[:, :, None]           # [bt, Nv, 1]
    mult2 = bdot(t * s2, t, ((1,), (1,)))                        # [bt, Ne, Ne]
    adj2 = adje_ref[...] * jnp.where(eyee, 1.0, mult2)
    col_max = jnp.max(adj2, axis=1, keepdims=True)               # per-column max
    inv = pl.reciprocal(jnp.maximum(col_max, 1e-20), approx=True)  # EUP recip
    norm2 = adj2 * inv
    z2 = jnp.maximum(
        bdot(norm2, proj(z, w2_ref), ((2,), (1,))) + b2_ref[...], 0.0)

    # ---------------- gc3 : node layer ----------------
    s3 = jnp.sum(z2 * p3_ref[...], axis=2)[:, None, :]           # [bt, 1, Ne]
    mult3 = bdot(t * s3, t, ((2,), (2,)))                        # [bt, Nv, Nv]
    adj3 = adjv * jnp.where(eyev, 1.0, mult3)
    out_ref[...] = bdot(adj3, proj(x1, w3_ref), ((2,), (1,))) + b3_ref[...]


# ----------------------------- wrapper -----------------------------

def pattern_graph_conv2d_forward(params, x, Z, adj_e, adj_v, T, *, batch_block=8):
    """Matches GCN.forward: gc1(node) -> relu -> gc2(edge) -> relu -> gc3(node)."""
    B, Nv, Fv = x.shape
    _, Ne, Fe = Z.shape
    nhid = params["gc1"]["weight"].shape[1]
    fe_mid = params["gc2"]["weight"].shape[1]          # 128
    fout = params["gc3"]["weight"].shape[1]            # nfeat_v
    fout_pad = _round_up(max(fout, 128), 128)          # lane-dense output stores

    # Sublane-align the graph dims (blocks equal full array dims, so this only
    # improves vreg/MXU occupancy; padded rows/cols are zero and provably inert).
    Nv_p = _round_up(Nv, 8)
    Ne_p = _round_up(Ne, 8)

    # --- batch blocking: keep >= 2 grid steps (megacore + pipelining), pad B ---
    bt = max(1, min(batch_block, B))
    if B >= 2:
        bt = min(bt, max(1, B // 2))

    # Generation-aware VMEM budget (v7x: 64 MiB/TC, v5e/v6e: 128 MiB).
    try:
        vmem_cap = int(pltpu.get_tpu_info().vmem_capacity_bytes)
    except Exception:  # not on a TPU / info unavailable
        vmem_cap = 128 * 1024 * 1024
    vmem_limit = int(min(vmem_cap * 3 // 4, 100 * 1024 * 1024))

    per_b_in = 4 * (Nv_p * Fv + Ne_p * Fe + Nv_p * Nv_p + Ne_p * Ne_p
                    + Nv_p * Ne_p + Nv_p * fout_pad)
    per_b_tmp = 4 * (Nv_p * nhid + Ne_p * fe_mid + 2 * Nv_p * Nv_p
                     + 2 * Ne_p * Ne_p + Nv_p * Ne_p)
    while bt > 1 and bt * (2 * per_b_in + per_b_tmp) > vmem_limit // 2:
        bt -= 1
    B_pad = _round_up(B, bt)

    def pad3(a, n1, n2):
        return jnp.pad(a, ((0, B_pad - B),
                           (0, n1 - a.shape[1]),
                           (0, n2 - a.shape[2])))

    xp = pad3(x, Nv_p, Fv)
    zp = pad3(Z, Ne_p, Fe)
    adjvp = pad3(adj_v, Nv_p, Nv_p)
    adjep = pad3(adj_e, Ne_p, Ne_p)
    tp = pad3(T, Nv_p, Ne_p)

    w1, p1 = params["gc1"]["weight"], params["gc1"]["p"]
    b1 = params["gc1"]["bias"].reshape(1, -1)
    w2, p2 = params["gc2"]["weight"], params["gc2"]["p"]
    b2 = params["gc2"]["bias"].reshape(1, -1)
    w3, p3 = params["gc3"]["weight"], params["gc3"]["p"]
    b3 = params["gc3"]["bias"].reshape(1, -1)

    # Zero-pad gc3's weight/bias out to fout_pad columns; padded output columns
    # are exactly zero and are sliced off below.
    w3p = jnp.zeros((nhid, fout_pad), jnp.float32).at[:, :fout].set(w3)
    b3p = jnp.zeros((1, fout_pad), jnp.float32).at[:, :fout].set(b3)

    out = pl.pallas_call(
        _fused_gcn_kernel,
        out_shape=jax.ShapeDtypeStruct((B_pad, Nv_p, fout_pad), jnp.float32),
        grid=(B_pad // bt,),
        in_specs=[
            pl.BlockSpec((bt, Nv_p, Fv), lambda b: (b, 0, 0)),
            pl.BlockSpec((bt, Ne_p, Fe), lambda b: (b, 0, 0)),
            pl.BlockSpec((bt, Nv_p, Nv_p), lambda b: (b, 0, 0)),
            pl.BlockSpec((bt, Ne_p, Ne_p), lambda b: (b, 0, 0)),
            pl.BlockSpec((bt, Nv_p, Ne_p), lambda b: (b, 0, 0)),
            pl.BlockSpec((Fv, nhid), lambda b: (0, 0)),
            pl.BlockSpec((1, Fe), lambda b: (0, 0)),
            pl.BlockSpec((1, nhid), lambda b: (0, 0)),
            pl.BlockSpec((Fe, fe_mid), lambda b: (0, 0)),
            pl.BlockSpec((1, nhid), lambda b: (0, 0)),
            pl.BlockSpec((1, fe_mid), lambda b: (0, 0)),
            pl.BlockSpec((nhid, fout_pad), lambda b: (0, 0)),
            pl.BlockSpec((1, fe_mid), lambda b: (0, 0)),
            pl.BlockSpec((1, fout_pad), lambda b: (0, 0)),
        ],
        out_specs=pl.BlockSpec((bt, Nv_p, fout_pad), lambda b: (b, 0, 0)),
        compiler_params=pltpu.CompilerParams(
            dimension_semantics=("parallel",),
            vmem_limit_bytes=vmem_limit),
    )(xp, zp, adjvp, adjep, tp,
      w1, p1, b1, w2, p2, b2, w3p, p3, b3p)

    return out[:B, :Nv, :fout]


# ----------------------------- parameter init -----------------------------

def init_graph_conv_params(key, in_v, out_v, in_e, out_e, node_layer):
    """Deterministic init matching GraphConvolution.__init__ shapes."""
    k_w, k_p, k_b = jax.random.split(key, 3)
    if node_layer:
        stdv = 1.0 / math.sqrt(out_v)
        weight = jax.random.uniform(k_w, (in_v, out_v), jnp.float32, -stdv, stdv)
        p = jax.random.normal(k_p, (1, in_e), jnp.float32)
        bias = jax.random.uniform(k_b, (out_v,), jnp.float32, -stdv, stdv)
    else:
        stdv = 1.0 / math.sqrt(out_e)
        weight = jax.random.uniform(k_w, (in_e, out_e), jnp.float32, -stdv, stdv)
        p = jax.random.normal(k_p, (1, in_v), jnp.float32)
        bias = jax.random.uniform(k_b, (out_e,), jnp.float32, -stdv, stdv)
    return {"weight": weight, "p": p, "bias": bias}


def init_pattern_graph_conv2d(key, in_features_v, in_features_e, nhid):
    """PatternGraphConv2d(conv='gc') -> GCN(in_v, in_e, nhid) parameters."""
    k1, k2, k3 = jax.random.split(key, 3)
    return {
        # gc1: GraphConvolution(in_v, nhid, in_e, in_e, node_layer=True)
        "gc1": init_graph_conv_params(k1, in_features_v, nhid,
                                      in_features_e, in_features_e, True),
        # gc2: GraphConvolution(nhid, nhid, in_e, 128, node_layer=False)
        "gc2": init_graph_conv_params(k2, nhid, nhid,
                                      in_features_e, 128, False),
        # gc3: GraphConvolution(nhid, in_v, 128, in_e, node_layer=True)
        "gc3": init_graph_conv_params(k3, nhid, in_features_v,
                                      128, in_features_e, True),
    }


# ----------------------------- pure-JAX reference -----------------------------
# Straight f32 transcription of the PyTorch module (exact division, no approx),
# so the allclose check validates fidelity to the original math.

def _ref_forward(params, x, Z, adj_e, adj_v, T):
    f32 = jnp.float32
    Tt = jnp.swapaxes(T, 1, 2)
    eyev = jnp.eye(adj_v.shape[1], dtype=f32)
    eyee = jnp.eye(adj_e.shape[1], dtype=f32)

    w1, p1, b1 = (params["gc1"][k] for k in ("weight", "p", "bias"))
    w2, p2, b2 = (params["gc2"][k] for k in ("weight", "p", "bias"))
    w3, p3, b3 = (params["gc3"][k] for k in ("weight", "p", "bias"))

    # gc1 (node layer)
    s1 = jnp.sum(Z * p1, axis=2, keepdims=True)
    m1 = jnp.matmul(T, s1 * Tt)
    a1 = (eyev + (1.0 - eyev) * m1) * adj_v
    X1 = jax.nn.relu(jnp.matmul(a1, jnp.matmul(x, w1)) + b1)

    # gc2 (edge layer)
    s2 = jnp.sum(X1 * p2, axis=2, keepdims=True)
    m2 = jnp.matmul(Tt, s2 * T)
    a2 = (eyee + (1.0 - eyee) * m2) * adj_e
    a2 = a2 / jnp.max(a2, axis=1, keepdims=True)
    Z2 = jax.nn.relu(jnp.matmul(a2, jnp.matmul(Z, w2)) + b2)

    # gc3 (node layer)
    s3 = jnp.sum(Z2 * p3, axis=2, keepdims=True)
    m3 = jnp.matmul(T, s3 * Tt)
    a3 = (eyev + (1.0 - eyev) * m3) * adj_v
    return jnp.matmul(a3, jnp.matmul(X1, w3)) + b3


# ----------------------------- main -----------------------------

if __name__ == "__main__":
    B, Nv, Ne = 2, 8, 12
    nfeat_v, nfeat_e, nhid = 4, 6, 32

    key = jax.random.PRNGKey(0)
    kx, kz, kae, kav, kt, kp = jax.random.split(key, 6)

    x = jax.random.normal(kx, (B, Nv, nfeat_v), jnp.float32)
    Z = jax.random.normal(kz, (B, Ne, nfeat_e), jnp.float32)
    # strictly positive adjacencies (avoids 0/0 in the edge-layer column norm,
    # matching the behaviour the PyTorch code relies on)
    adj_e = jax.random.uniform(kae, (B, Ne, Ne), jnp.float32, 0.1, 1.0)
    adj_v = jax.random.uniform(kav, (B, Nv, Nv), jnp.float32, 0.1, 1.0)
    T = (jax.random.uniform(kt, (B, Nv, Ne), jnp.float32) > 0.5
         ).astype(jnp.float32)  # dense stand-in for the sparse incidence matrix

    params = init_pattern_graph_conv2d(kp, nfeat_v, nfeat_e, nhid)

    fwd = jax.jit(pattern_graph_conv2d_forward)
    out = jax.block_until_ready(fwd(params, x, Z, adj_e, adj_v, T))

    ref = jax.block_until_ready(_ref_forward(params, x, Z, adj_e, adj_v, T))
    assert out.shape == (B, Nv, nfeat_v)
    # Tolerance covers the EUP approximate-reciprocal column normalization.
    assert jnp.allclose(out, ref, atol=1e-2, rtol=1e-2)

    print("KERNEL_OK")
</pallas_src>

<mosaic_0001>
module attributes {stable_mosaic.version = 11 : i64} {
  func.func @_fused_gcn_kernel(%arg0: i32, %arg1: memref<1x8x4xf32, #tpu.memory_space<vmem>>, %arg2: memref<1x16x6xf32, #tpu.memory_space<vmem>>, %arg3: memref<1x8x8xf32, #tpu.memory_space<vmem>>, %arg4: memref<1x16x16xf32, #tpu.memory_space<vmem>>, %arg5: memref<1x8x16xf32, #tpu.memory_space<vmem>>, %arg6: memref<4x32xf32, #tpu.memory_space<vmem>>, %arg7: memref<1x6xf32, #tpu.memory_space<vmem>>, %arg8: memref<1x32xf32, #tpu.memory_space<vmem>>, %arg9: memref<6x128xf32, #tpu.memory_space<vmem>>, %arg10: memref<1x32xf32, #tpu.memory_space<vmem>>, %arg11: memref<1x128xf32, #tpu.memory_space<vmem>>, %arg12: memref<32x128xf32, #tpu.memory_space<vmem>>, %arg13: memref<1x128xf32, #tpu.memory_space<vmem>>, %arg14: memref<1x128xf32, #tpu.memory_space<vmem>>, %arg15: memref<1x8x128xf32, #tpu.memory_space<vmem>>) attributes {dimension_semantics = [#tpu.dimension_semantics<parallel>], iteration_bounds = array<i64: 2>, scalar_prefetch = 0 : i64, scratch_operands = 0 : i64, tpu.core_type = #tpu.core_type<tc>, window_params = [{transform_indices = @transform_0, window_bounds = array<i64: 1, 8, 4>}, {transform_indices = @transform_1, window_bounds = array<i64: 1, 16, 6>}, {transform_indices = @transform_2, window_bounds = array<i64: 1, 8, 8>}, {transform_indices = @transform_3, window_bounds = array<i64: 1, 16, 16>}, {transform_indices = @transform_4, window_bounds = array<i64: 1, 8, 16>}, {pipeline_mode = #tpu.pipeline_mode<synchronous>, transform_indices = @transform_5, window_bounds = array<i64: 4, 32>}, {pipeline_mode = #tpu.pipeline_mode<synchronous>, transform_indices = @transform_6, window_bounds = array<i64: 1, 6>}, {pipeline_mode = #tpu.pipeline_mode<synchronous>, transform_indices = @transform_7, window_bounds = array<i64: 1, 32>}, {pipeline_mode = #tpu.pipeline_mode<synchronous>, transform_indices = @transform_8, window_bounds = array<i64: 6, 128>}, {pipeline_mode = #tpu.pipeline_mode<synchronous>, transform_indices = @transform_9, window_bounds = array<i64: 1, 32>}, {pipeline_mode = #tpu.pipeline_mode<synchronous>, transform_indices = @transform_10, window_bounds = array<i64: 1, 128>}, {pipeline_mode = #tpu.pipeline_mode<synchronous>, transform_indices = @transform_11, window_bounds = array<i64: 32, 128>}, {pipeline_mode = #tpu.pipeline_mode<synchronous>, transform_indices = @transform_12, window_bounds = array<i64: 1, 128>}, {pipeline_mode = #tpu.pipeline_mode<synchronous>, transform_indices = @transform_13, window_bounds = array<i64: 1, 128>}, {transform_indices = @transform_14, window_bounds = array<i64: 1, 8, 128>}]} {
    %0 = tpu.iota {dimensions = array<i32: 0>} : vector<8x8xi32>
    %1 = tpu.iota {dimensions = array<i32: 1>} : vector<8x8xi32>
    %2 = arith.cmpi eq, %0, %1 : vector<8x8xi32>
    %3 = tpu.iota {dimensions = array<i32: 0>} : vector<16x16xi32>
    %4 = tpu.iota {dimensions = array<i32: 1>} : vector<16x16xi32>
    %5 = arith.cmpi eq, %3, %4 : vector<16x16xi32>
    %c0 = arith.constant 0 : index
    %c0_0 = arith.constant 0 : index
    %c0_1 = arith.constant 0 : index
    %6 = vector.load %arg5[%c0, %c0_0, %c0_1] : memref<1x8x16xf32, #tpu.memory_space<vmem>>, vector<1x8x16xf32>
    %c0_2 = arith.constant 0 : index
    %c0_3 = arith.constant 0 : index
    %c0_4 = arith.constant 0 : index
    %7 = vector.load %arg2[%c0_2, %c0_3, %c0_4] : memref<1x16x6xf32, #tpu.memory_space<vmem>>, vector<1x16x6xf32>
    %c0_5 = arith.constant 0 : index
    %c0_6 = arith.constant 0 : index
    %c0_7 = arith.constant 0 : index
    %8 = vector.load %arg3[%c0_5, %c0_6, %c0_7] : memref<1x8x8xf32, #tpu.memory_space<vmem>>, vector<1x8x8xf32>
    %c0_8 = arith.constant 0 : index
    %c0_9 = arith.constant 0 : index
    %9 = vector.load %arg7[%c0_8, %c0_9] : memref<1x6xf32, #tpu.memory_space<vmem>>, vector<1x6xf32>
    %10 = vector.shape_cast %9 : vector<1x6xf32> to vector<1x1x6xf32>
    %11 = vector.broadcast %10 : vector<1x1x6xf32> to vector<1x16x6xf32>
    %12 = arith.mulf %7, %11 : vector<1x16x6xf32>
    %cst = arith.constant dense<0.000000e+00> : vector<1x16xf32>
    %13 = vector.multi_reduction <add>, %12, %cst [2] : vector<1x16x6xf32> to vector<1x16xf32>
    %14 = vector.shape_cast %13 : vector<1x16xf32> to vector<1x1x16xf32>
    %15 = vector.broadcast %14 : vector<1x1x16xf32> to vector<1x8x16xf32>
    %16 = arith.mulf %6, %15 : vector<1x8x16xf32>
    %cst_10 = arith.constant dense<0.000000e+00> : vector<1x8x8xf32>
    %17 = tpu.matmul %16, %6, %cst_10 {dimension_numbers = #tpu.dot_dimension_numbers<[2], [2], [1], [1], [0, 0, 0, 1, 1, 1], [0], [0]>} : vector<1x8x16xf32>, vector<1x8x16xf32>, vector<1x8x8xf32> -> vector<1x8x8xf32>
    %cst_11 = arith.constant 1.000000e+00 : f32
    %18 = vector.shape_cast %2 : vector<8x8xi1> to vector<1x8x8xi1>
    %19 = vector.broadcast %cst_11 : f32 to vector<1x8x8xf32>
    %20 = arith.select %18, %19, %17 : vector<1x8x8xi1>, vector<1x8x8xf32>
    %21 = arith.mulf %8, %20 : vector<1x8x8xf32>
    %c0_12 = arith.constant 0 : index
    %c0_13 = arith.constant 0 : index
    %c0_14 = arith.constant 0 : index
    %22 = vector.load %arg1[%c0_12, %c0_13, %c0_14] : memref<1x8x4xf32, #tpu.memory_space<vmem>>, vector<1x8x4xf32>
    %c0_15 = arith.constant 0 : index
    %c0_16 = arith.constant 0 : index
    %23 = vector.load %arg6[%c0_15, %c0_16] : memref<4x32xf32, #tpu.memory_space<vmem>>, vector<4x32xf32>
    %24 = vector.shape_cast %22 : vector<1x8x4xf32> to vector<8x4xf32>
    %cst_17 = arith.constant dense<0.000000e+00> : vector<8x32xf32>
    %25 = tpu.matmul %24, %23, %cst_17 {dimension_numbers = #tpu.dot_dimension_numbers<[1], [0], [0], [1], [0, 0, 1, 1], [], []>} : vector<8x4xf32>, vector<4x32xf32>, vector<8x32xf32> -> vector<8x32xf32>
    %26 = vector.shape_cast %25 : vector<8x32xf32> to vector<1x8x32xf32>
    %cst_18 = arith.constant dense<0.000000e+00> : vector<1x8x32xf32>
    %27 = tpu.matmul %21, %26, %cst_18 {dimension_numbers = #tpu.dot_dimension_numbers<[2], [1], [1], [2], [0, 0, 0, 1, 1, 2], [0], [0]>} : vector<1x8x8xf32>, vector<1x8x32xf32>, vector<1x8x32xf32> -> vector<1x8x32xf32>
    %c0_19 = arith.constant 0 : index
    %c0_20 = arith.constant 0 : index
    %28 = vector.load %arg8[%c0_19, %c0_20] : memref<1x32xf32, #tpu.memory_space<vmem>>, vector<1x32xf32>
    %29 = vector.shape_cast %28 : vector<1x32xf32> to vector<1x1x32xf32>
    %30 = vector.broadcast %29 : vector<1x1x32xf32> to vector<1x8x32xf32>
    %31 = arith.addf %27, %30 : vector<1x8x32xf32>
    %cst_21 = arith.constant 0.000000e+00 : f32
    %32 = vector.broadcast %cst_21 : f32 to vector<1x8x32xf32>
    %33 = arith.maximumf %31, %32 : vector<1x8x32xf32>
    %c0_22 = arith.constant 0 : index
    %c0_23 = arith.constant 0 : index
    %34 = vector.load %arg10[%c0_22, %c0_23] : memref<1x32xf32, #tpu.memory_space<vmem>>, vector<1x32xf32>
    %35 = vector.shape_cast %34 : vector<1x32xf32> to vector<1x1x32xf32>
    %36 = vector.broadcast %35 : vector<1x1x32xf32> to vector<1x8x32xf32>
    %37 = arith.mulf %33, %36 : vector<1x8x32xf32>
    %cst_24 = arith.constant dense<0.000000e+00> : vector<1x8xf32>
    %38 = vector.multi_reduction <add>, %37, %cst_24 [2] : vector<1x8x32xf32> to vector<1x8xf32>
    %39 = vector.shape_cast %38 : vector<1x8xf32> to vector<1x8x1xf32>
    %40 = vector.broadcast %39 : vector<1x8x1xf32> to vector<1x8x16xf32>
    %41 = arith.mulf %6, %40 : vector<1x8x16xf32>
    %cst_25 = arith.constant dense<0.000000e+00> : vector<1x16x16xf32>
    %42 = tpu.matmul %41, %6, %cst_25 {dimension_numbers = #tpu.dot_dimension_numbers<[1], [1], [2], [2], [0, 0, 0, 2, 1, 2], [0], [0]>} : vector<1x8x16xf32>, vector<1x8x16xf32>, vector<1x16x16xf32> -> vector<1x16x16xf32>
    %c0_26 = arith.constant 0 : index
    %c0_27 = arith.constant 0 : index
    %c0_28 = arith.constant 0 : index
    %43 = vector.load %arg4[%c0_26, %c0_27, %c0_28] : memref<1x16x16xf32, #tpu.memory_space<vmem>>, vector<1x16x16xf32>
    %cst_29 = arith.constant 1.000000e+00 : f32
    %44 = vector.shape_cast %5 : vector<16x16xi1> to vector<1x16x16xi1>
    %45 = vector.broadcast %cst_29 : f32 to vector<1x16x16xf32>
    %46 = arith.select %44, %45, %42 : vector<1x16x16xi1>, vector<1x16x16xf32>
    %47 = arith.mulf %43, %46 : vector<1x16x16xf32>
    %cst_30 = arith.constant dense<0xFF800000> : vector<1x16xf32>
    %48 = vector.multi_reduction <maximumf>, %47, %cst_30 [1] : vector<1x16x16xf32> to vector<1x16xf32>
    %49 = vector.shape_cast %48 : vector<1x16xf32> to vector<1x1x16xf32>
    %cst_31 = arith.constant 9.99999968E-21 : f32
    %50 = vector.broadcast %cst_31 : f32 to vector<1x1x16xf32>
    %51 = arith.maximumf %49, %50 : vector<1x1x16xf32>
    %52 = tpu.reciprocal %51 {approx = true} : vector<1x1x16xf32> -> vector<1x1x16xf32>
    %53 = vector.broadcast %52 : vector<1x1x16xf32> to vector<1x16x16xf32>
    %54 = arith.mulf %47, %53 : vector<1x16x16xf32>
    %c0_32 = arith.constant 0 : index
    %c0_33 = arith.constant 0 : index
    %55 = vector.load %arg9[%c0_32, %c0_33] : memref<6x128xf32, #tpu.memory_space<vmem>>, vector<6x128xf32>
    %56 = vector.shape_cast %7 : vector<1x16x6xf32> to vector<16x6xf32>
    %cst_34 = arith.constant dense<0.000000e+00> : vector<16x128xf32>
    %57 = tpu.matmul %56, %55, %cst_34 {dimension_numbers = #tpu.dot_dimension_numbers<[1], [0], [0], [1], [0, 0, 1, 1], [], []>} : vector<16x6xf32>, vector<6x128xf32>, vector<16x128xf32> -> vector<16x128xf32>
    %58 = vector.shape_cast %57 : vector<16x128xf32> to vector<1x16x128xf32>
    %cst_35 = arith.constant dense<0.000000e+00> : vector<1x16x128xf32>
    %59 = tpu.matmul %54, %58, %cst_35 {dimension_numbers = #tpu.dot_dimension_numbers<[2], [1], [1], [2], [0, 0, 0, 1, 1, 2], [0], [0]>} : vector<1x16x16xf32>, vector<1x16x128xf32>, vector<1x16x128xf32> -> vector<1x16x128xf32>
    %c0_36 = arith.constant 0 : index
    %c0_37 = arith.constant 0 : index
    %60 = vector.load %arg11[%c0_36, %c0_37] : memref<1x128xf32, #tpu.memory_space<vmem>>, vector<1x128xf32>
    %61 = vector.shape_cast %60 : vector<1x128xf32> to vector<1x1x128xf32>
    %62 = vector.broadcast %61 : vector<1x1x128xf32> to vector<1x16x128xf32>
    %63 = arith.addf %59, %62 : vector<1x16x128xf32>
    %cst_38 = arith.constant 0.000000e+00 : f32
    %64 = vector.broadcast %cst_38 : f32 to vector<1x16x128xf32>
    %65 = arith.maximumf %63, %64 : vector<1x16x128xf32>
    %c0_39 = arith.constant 0 : index
    %c0_40 = arith.constant 0 : index
    %66 = vector.load %arg13[%c0_39, %c0_40] : memref<1x128xf32, #tpu.memory_space<vmem>>, vector<1x128xf32>
    %67 = vector.shape_cast %66 : vector<1x128xf32> to vector<1x1x128xf32>
    %68 = vector.broadcast %67 : vector<1x1x128xf32> to vector<1x16x128xf32>
    %69 = arith.mulf %65, %68 : vector<1x16x128xf32>
    %cst_41 = arith.constant dense<0.000000e+00> : vector<1x16xf32>
    %70 = vector.multi_reduction <add>, %69, %cst_41 [2] : vector<1x16x128xf32> to vector<1x16xf32>
    %71 = vector.shape_cast %70 : vector<1x16xf32> to vector<1x1x16xf32>
    %72 = vector.broadcast %71 : vector<1x1x16xf32> to vector<1x8x16xf32>
    %73 = arith.mulf %6, %72 : vector<1x8x16xf32>
    %cst_42 = arith.constant dense<0.000000e+00> : vector<1x8x8xf32>
    %74 = tpu.matmul %73, %6, %cst_42 {dimension_numbers = #tpu.dot_dimension_numbers<[2], [2], [1], [1], [0, 0, 0, 1, 1, 1], [0], [0]>} : vector<1x8x16xf32>, vector<1x8x16xf32>, vector<1x8x8xf32> -> vector<1x8x8xf32>
    %cst_43 = arith.constant 1.000000e+00 : f32
    %75 = vector.shape_cast %2 : vector<8x8xi1> to vector<1x8x8xi1>
    %76 = vector.broadcast %cst_43 : f32 to vector<1x8x8xf32>
    %77 = arith.select %75, %76, %74 : vector<1x8x8xi1>, vector<1x8x8xf32>
    %78 = arith.mulf %8, %77 : vector<1x8x8xf32>
    %c0_44 = arith.constant 0 : index
    %c0_45 = arith.constant 0 : index
    %79 = vector.load %arg12[%c0_44, %c0_45] : memref<32x128xf32, #tpu.memory_space<vmem>>, vector<32x128xf32>
    %80 = vector.shape_cast %33 : vector<1x8x32xf32> to vector<8x32xf32>
    %cst_46 = arith.constant dense<0.000000e+00> : vector<8x128xf32>
    %81 = tpu.matmul %80, %79, %cst_46 {dimension_numbers = #tpu.dot_dimension_numbers<[1], [0], [0], [1], [0, 0, 1, 1], [], []>} : vector<8x32xf32>, vector<32x128xf32>, vector<8x128xf32> -> vector<8x128xf32>
    %82 = vector.shape_cast %81 : vector<8x128xf32> to vector<1x8x128xf32>
    %cst_47 = arith.constant dense<0.000000e+00> : vector<1x8x128xf32>
    %83 = tpu.matmul %78, %82, %cst_47 {dimension_numbers = #tpu.dot_dimension_numbers<[2], [1], [1], [2], [0, 0, 0, 1, 1, 2], [0], [0]>} : vector<1x8x8xf32>, vector<1x8x128xf32>, vector<1x8x128xf32> -> vector<1x8x128xf32>
    %c0_48 = arith.constant 0 : index
    %c0_49 = arith.constant 0 : index
    %84 = vector.load %arg14[%c0_48, %c0_49] : memref<1x128xf32, #tpu.memory_space<vmem>>, vector<1x128xf32>
    %85 = vector.shape_cast %84 : vector<1x128xf32> to vector<1x1x128xf32>
    %86 = vector.broadcast %85 : vector<1x1x128xf32> to vector<1x8x128xf32>
    %87 = arith.addf %83, %86 : vector<1x8x128xf32>
    %c0_50 = arith.constant 0 : index
    %c0_51 = arith.constant 0 : index
    %c0_52 = arith.constant 0 : index
    %88 = vector.load %arg15[%c0_50, %c0_51, %c0_52] : memref<1x8x128xf32, #tpu.memory_space<vmem>>, vector<1x8x128xf32>
    tpu.vector_store %arg15[%c0_50, %c0_51, %c0_52], %87 {strides = array<i32>} : memref<1x8x128xf32, #tpu.memory_space<vmem>>, vector<1x8x128xf32>,
    return
  }
  func.func @transform_0(%arg0: i32) -> (i32, i32, i32) {
    %c0_i32 = arith.constant 0 : i32
    %c0_i32_0 = arith.constant 0 : i32
    %c0_i32_1 = arith.constant 0 : i32
    return %arg0, %c0_i32, %c0_i32_0 : i32, i32, i32
  }
  func.func @transform_1(%arg0: i32) -> (i32, i32, i32) {
    %c0_i32 = arith.constant 0 : i32
    %c0_i32_0 = arith.constant 0 : i32
    %c0_i32_1 = arith.constant 0 : i32
    return %arg0, %c0_i32, %c0_i32_0 : i32, i32, i32
  }
  func.func @transform_2(%arg0: i32) -> (i32, i32, i32) {
    %c0_i32 = arith.constant 0 : i32
    %c0_i32_0 = arith.constant 0 : i32
    %c0_i32_1 = arith.constant 0 : i32
    return %arg0, %c0_i32, %c0_i32_0 : i32, i32, i32
  }
  func.func @transform_3(%arg0: i32) -> (i32, i32, i32) {
    %c0_i32 = arith.constant 0 : i32
    %c0_i32_0 = arith.constant 0 : i32
    %c0_i32_1 = arith.constant 0 : i32
    return %arg0, %c0_i32, %c0_i32_0 : i32, i32, i32
  }
  func.func @transform_4(%arg0: i32) -> (i32, i32, i32) {
    %c0_i32 = arith.constant 0 : i32
    %c0_i32_0 = arith.constant 0 : i32
    %c0_i32_1 = arith.constant 0 : i32
    return %arg0, %c0_i32, %c0_i32_0 : i32, i32, i32
  }
  func.func @transform_5(%arg0: i32) -> (i32, i32) {
    %c0_i32 = arith.constant 0 : i32
    %c0_i32_0 = arith.constant 0 : i32
    %c0_i32_1 = arith.constant 0 : i32
    return %c0_i32, %c0_i32_0 : i32, i32
  }
  func.func @transform_6(%arg0: i32) -> (i32, i32) {
    %c0_i32 = arith.constant 0 : i32
    %c0_i32_0 = arith.constant 0 : i32
    %c0_i32_1 = arith.constant 0 : i32
    return %c0_i32, %c0_i32_0 : i32, i32
  }
  func.func @transform_7(%arg0: i32) -> (i32, i32) {
    %c0_i32 = arith.constant 0 : i32
    %c0_i32_0 = arith.constant 0 : i32
    %c0_i32_1 = arith.constant 0 : i32
    return %c0_i32, %c0_i32_0 : i32, i32
  }
  func.func @transform_8(%arg0: i32) -> (i32, i32) {
    %c0_i32 = arith.constant 0 : i32
    %c0_i32_0 = arith.constant 0 : i32
    %c0_i32_1 = arith.constant 0 : i32
    return %c0_i32, %c0_i32_0 : i32, i32
  }
  func.func @transform_9(%arg0: i32) -> (i32, i32) {
    %c0_i32 = arith.constant 0 : i32
    %c0_i32_0 = arith.constant 0 : i32
    %c0_i32_1 = arith.constant 0 : i32
    return %c0_i32, %c0_i32_0 : i32, i32
  }
  func.func @transform_10(%arg0: i32) -> (i32, i32) {
    %c0_i32 = arith.constant 0 : i32
    %c0_i32_0 = arith.constant 0 : i32
    %c0_i32_1 = arith.constant 0 : i32
    return %c0_i32, %c0_i32_0 : i32, i32
  }
  func.func @transform_11(%arg0: i32) -> (i32, i32) {
    %c0_i32 = arith.constant 0 : i32
    %c0_i32_0 = arith.constant 0 : i32
    %c0_i32_1 = arith.constant 0 : i32
    return %c0_i32, %c0_i32_0 : i32, i32
  }
  func.func @transform_12(%arg0: i32) -> (i32, i32) {
    %c0_i32 = arith.constant 0 : i32
    %c0_i32_0 = arith.constant 0 : i32
    %c0_i32_1 = arith.constant 0 : i32
    return %c0_i32, %c0_i32_0 : i32, i32
  }
  func.func @transform_13(%arg0: i32) -> (i32, i32) {
    %c0_i32 = arith.constant 0 : i32
    %c0_i32_0 = arith.constant 0 : i32
    %c0_i32_1 = arith.constant 0 : i32
    return %c0_i32, %c0_i32_0 : i32, i32
  }
  func.func @transform_14(%arg0: i32) -> (i32, i32, i32) {
    %c0_i32 = arith.constant 0 : i32
    %c0_i32_0 = arith.constant 0 : i32
    %c0_i32_1 = arith.constant 0 : i32
    return %arg0, %c0_i32, %c0_i32_0 : i32, i32, i32
  }
}

</mosaic_0001>

<llo_original>
// kernel: pattern_graph_conv2d_forward.1
$region0: #{pattern_graph_conv2d_forward.1}
  #allocation0 [shape = 'u32[]', space=smem, size = 0x4, offset = 0x4, fixed_abs, tag = 'smem constant byte address 0x4 - core index']
  #allocation1 [shape = 'u32[144,128]{1,0:T(1,128)}', space=vmem, size = 0x12000, scoped, tag = 'internal scratch']
  %s0 = inlined_call_operand.hbm [shape: f32[2,8,4], index: 0, kind: input, shape index: {}]
  %s1 = inlined_call_operand.hbm [shape: f32[2,16,6], index: 1, kind: input, shape index: {}]
  %s2 = inlined_call_operand.hbm [shape: f32[2,8,8], index: 2, kind: input, shape index: {}]
  %s3 = inlined_call_operand.hbm [shape: f32[2,16,16], index: 3, kind: input, shape index: {}]
  %s4 = inlined_call_operand.hbm [shape: f32[2,8,16], index: 4, kind: input, shape index: {}]
  %s5 = inlined_call_operand.hbm [shape: f32[4,32], index: 5, kind: input, shape index: {}]
  %s6 = inlined_call_operand.hbm [shape: f32[1,6], index: 6, kind: input, shape index: {}]
  %s7 = inlined_call_operand.hbm [shape: f32[1,32], index: 7, kind: input, shape index: {}]
  %s8 = inlined_call_operand.hbm [shape: f32[6,128], index: 8, kind: input, shape index: {}]
  %s9 = inlined_call_operand.hbm [shape: f32[1,32], index: 9, kind: input, shape index: {}]
  %s10 = inlined_call_operand.hbm [shape: f32[1,128], index: 10, kind: input, shape index: {}]
  %s11 = inlined_call_operand.hbm [shape: f32[32,128], index: 11, kind: input, shape index: {}]
  %s12 = inlined_call_operand.hbm [shape: f32[1,128], index: 12, kind: input, shape index: {}]
  %s13 = inlined_call_operand.hbm [shape: f32[1,128], index: 13, kind: input, shape index: {}]
  %s14 = inlined_call_operand.hbm [shape: f32[2,8,128], index: 14, kind: output, shape index: {}]
  %s15 = sld [smem:[#allocation0]]
  $region145: #{pattern_graph_conv2d_forward.1} parent=0
    _
  %s17 = ssub.s32 1, %s15
  %s18 = scalar_select 0, %s17, %s15
  $region1: #{pattern_graph_conv2d_forward.1} parent=0
    #allocation2 [shape = 'u8[8192]{0}', space=vmem, size = 0x2000, scoped, tag = 'input window, operand 0']
    #allocation3 [shape = 's32[2]{0}', space=sflag, size = 0x8, scoped, tag = 'scoped memory for pattern_graph_conv2d_forward.1']
    #allocation4 [shape = 's32[2]{0}', space=sflag, size = 0x8, scoped, tag = 'scoped memory for pattern_graph_conv2d_forward.1']
    #allocation5 [shape = 'u8[16384]{0}', space=vmem, size = 0x4000, scoped, tag = 'input window, operand 1']
    #allocation6 [shape = 's32[2]{0}', space=sflag, size = 0x8, scoped, tag = 'scoped memory for pattern_graph_conv2d_forward.1']
    #allocation7 [shape = 'u8[8192]{0}', space=vmem, size = 0x2000, scoped, tag = 'input window, operand 2']
    #allocation8 [shape = 'u8[16384]{0}', space=vmem, size = 0x4000, scoped, tag = 'input window, operand 3']
    #allocation9 [shape = 's32[2]{0}', space=sflag, size = 0x8, scoped, tag = 'scoped memory for pattern_graph_conv2d_forward.1']
    #allocation10 [shape = 'u8[8192]{0}', space=vmem, size = 0x2000, scoped, tag = 'input window, operand 4']
    #allocation11 [shape = 'u8[2048]{0}', space=vmem, size = 0x800, scoped, tag = 'input window, operand 5, single buffered']
    #allocation12 [shape = 's32[1]{0}', space=sflag, size = 0x4, scoped, tag = 'scoped memory for pattern_graph_conv2d_forward.1']
    #allocation13 [shape = 'u8[512]{0}', space=vmem, size = 0x400, scoped, tag = 'input window, operand 6, single buffered']
    #allocation14 [shape = 'u8[512]{0}', space=vmem, size = 0x400, scoped, tag = 'input window, operand 7, single buffered']
    #allocation15 [shape = 's32[1]{0}', space=sflag, size = 0x4, scoped, tag = 'scoped memory for pattern_graph_conv2d_forward.1']
    #allocation16 [shape = 'u8[4096]{0}', space=vmem, size = 0x1000, scoped, tag = 'input window, operand 8, single buffered']
    #allocation17 [shape = 'u8[512]{0}', space=vmem, size = 0x400, scoped, tag = 'input window, operand 9, single buffered']
    #allocation18 [shape = 's32[1]{0}', space=sflag, size = 0x4, scoped, tag = 'scoped memory for pattern_graph_conv2d_forward.1']
    #allocation19 [shape = 'u8[512]{0}', space=vmem, size = 0x400, scoped, tag = 'input window, operand 10, single buffered']
    #allocation20 [shape = 'u8[16384]{0}', space=vmem, size = 0x4000, scoped, tag = 'input window, operand 11, single buffered']
    #allocation21 [shape = 's32[1]{0}', space=sflag, size = 0x4, scoped, tag = 'scoped memory for pattern_graph_conv2d_forward.1']
    #allocation22 [shape = 'u8[512]{0}', space=vmem, size = 0x400, scoped, tag = 'input window, operand 12, single buffered']
    #allocation23 [shape = 'u8[512]{0}', space=vmem, size = 0x400, scoped, tag = 'input window, operand 13, single buffered']
    #allocation24 [shape = 's32[1]{0}', space=sflag, size = 0x4, scoped, tag = 'scoped memory for pattern_graph_conv2d_forward.1']
    #allocation25 [shape = 'u8[8192]{0}', space=vmem, size = 0x2000, scoped, tag = 'output window, operand 0']
    %19 = vsyncpa [#allocation3], 0
    %s20 = scalar_lea.sflag [#allocation3], 1
    %21 = vsyncpa %s20, 0
    %22 = vsyncpa [#allocation6], 0
    %s23 = scalar_lea.sflag [#allocation6], 1
    %24 = vsyncpa %s23, 0
    %25 = vsyncpa [#allocation9], 0
    %s26 = scalar_lea.sflag [#allocation9], 1
    %27 = vsyncpa %s26, 0
    %28 = vsyncpa [#allocation12], 0
    %29 = vsyncpa [#allocation15], 0
    %30 = vsyncpa [#allocation18], 0
    %31 = vsyncpa [#allocation21], 0
    %32 = vsyncpa [#allocation24], 0
    %33 = vsyncpa [#allocation4], 0
    %s34 = scalar_lea.sflag [#allocation4], 1
    %35 = vsyncpa %s34, 0
    loop: start=0, step=1, limit=4
    $region2: #{pattern_graph_conv2d_forward.1} parent=1 // loop_pre_header
      _
    $region3: #{pattern_graph_conv2d_forward.1} parent=1 // loop_header
      %s37 = sphi 0, %s41
      %p38 = scmp.ge.s32.totalorder %s37, 4
      %s47 = sphi 0, %s49
      %s50 = sphi 0, %s47
      %s51 = sphi 0, %s50
      %s67 = sphi 0, %s51
      %s73 = sphi 0, %s75
      %s76 = sphi 0, %s73
      %s77 = sphi 0, %s76
      %s93 = sphi 0, %s77
      %s99 = sphi 0, %s101
      %s102 = sphi 0, %s99
      %s103 = sphi 0, %s102
      %s119 = sphi 0, %s103
      %s125 = sphi 0, %s127
      %s128 = sphi 0, %s125
      %s129 = sphi 0, %s128
      %s145 = sphi 0, %s129
      %s151 = sphi 0, %s153
      %s154 = sphi 0, %s151
      %s155 = sphi 0, %s154
      %s171 = sphi 0, %s155
      %s175 = sphi 0, %s175
      %s177 = sphi 0, %s175
      %s178 = sphi 0, %s177
      %s192 = sphi 0, %s178
      %s196 = sphi 0, %s196
      %s198 = sphi 0, %s196
      %s199 = sphi 0, %s198
      %s213 = sphi 0, %s199
      %s217 = sphi 0, %s217
      %s219 = sphi 0, %s217
      %s220 = sphi 0, %s219
      %s234 = sphi 0, %s220
      %s238 = sphi 0, %s238
      %s240 = sphi 0, %s238
      %s241 = sphi 0, %s240
      %s255 = sphi 0, %s241
      %s259 = sphi 0, %s259
      %s261 = sphi 0, %s259
      %s262 = sphi 0, %s261
      %s276 = sphi 0, %s262
      %s280 = sphi 0, %s280
      %s282 = sphi 0, %s280
      %s283 = sphi 0, %s282
      %s297 = sphi 0, %s283
      %s301 = sphi 0, %s301
      %s303 = sphi 0, %s301
      %s304 = sphi 0, %s303
      %s318 = sphi 0, %s304
      %s322 = sphi 0, %s322
      %s324 = sphi 0, %s322
      %s325 = sphi 0, %s324
      %s339 = sphi 0, %s325
      %s343 = sphi 0, %s343
      %s345 = sphi 0, %s343
      %s346 = sphi 0, %s345
      %s360 = sphi 0, %s346
      %s366 = sphi 0, %s368
      %s369 = sphi 0, %s366
      %s370 = sphi 0, %s369
      %s386 = sphi 0, %s370
    $region4: #{pattern_graph_conv2d_forward.1} parent=1 // loop_header_branch
      %40 = sbr.rel (%p38) target = $region8
    $region5: #{pattern_graph_conv2d_forward.1} parent=1 // loop_body
      %s42 = ssub.s32 %s37, 1
      %s43 = ssub.s32 %s37, 2
      %s44 = sadd.s32 %s37, 1
      %s45 = ssub.s32 %s37, %s44
      %p46 = scmp.eq.s32.totalorder %s45, 0
      %s48 = sadd.s32 %s47, 1
      %s49 = scalar_select %p46, %s47, %s48
      %p52 = pneg %p46
      %p53 = scmp.eq.s32.totalorder %s37, 1
      %p54 = por %p52, %p53
      %p55 = scmp.ne.s32.totalorder %s47, %s50
      %p56 = scmp.eq.s32.totalorder %s37, 0
      %p57 = por %p55, %p56
      %p58 = scmp.ne.s32.totalorder %s47, %s50
      %p59 = scmp.eq.s32.totalorder %s42, 1
      %p60 = por %p58, %p59
      %p61 = scmp.ne.s32.totalorder %s50, %s51
      %p62 = scmp.eq.s32.totalorder %s42, 0
      %p63 = por %p61, %p62
      %p64 = scmp.ne.s32.totalorder %s50, %s51
      %p65 = scmp.eq.s32.totalorder %s43, 1
      %p66 = por %p64, %p65
      %p68 = scmp.ne.s32.totalorder %s51, %s67
      %p69 = scmp.eq.s32.totalorder %s43, 0
      %p70 = por %p68, %p69
      %s71 = ssub.s32 %s37, %s44
      %p72 = scmp.eq.s32.totalorder %s71, 0
      %s74 = sadd.s32 %s73, 1
      %s75 = scalar_select %p72, %s73, %s74
      %p78 = pneg %p72
      %p79 = scmp.eq.s32.totalorder %s37, 1
      %p80 = por %p78, %p79
      %p81 = scmp.ne.s32.totalorder %s73, %s76
      %p82 = scmp.eq.s32.totalorder %s37, 0
      %p83 = por %p81, %p82
      %p84 = scmp.ne.s32.totalorder %s73, %s76
      %p85 = scmp.eq.s32.totalorder %s42, 1
      %p86 = por %p84, %p85
      %p87 = scmp.ne.s32.totalorder %s76, %s77
      %p88 = scmp.eq.s32.totalorder %s42, 0
      %p89 = por %p87, %p88
      %p90 = scmp.ne.s32.totalorder %s76, %s77
      %p91 = scmp.eq.s32.totalorder %s43, 1
      %p92 = por %p90, %p91
      %p94 = scmp.ne.s32.totalorder %s77, %s93
      %p95 = scmp.eq.s32.totalorder %s43, 0
      %p96 = por %p94, %p95
      %s97 = ssub.s32 %s37, %s44
      %p98 = scmp.eq.s32.totalorder %s97, 0
      %s100 = sadd.s32 %s99, 1
      %s101 = scalar_select %p98, %s99, %s100
      %p104 = pneg %p98
      %p105 = scmp.eq.s32.totalorder %s37, 1
      %p106 = por %p104, %p105
      %p107 = scmp.ne.s32.totalorder %s99, %s102
      %p108 = scmp.eq.s32.totalorder %s37, 0
      %p109 = por %p107, %p108
      %p110 = scmp.ne.s32.totalorder %s99, %s102
      %p111 = scmp.eq.s32.totalorder %s42, 1
      %p112 = por %p110, %p111
      %p113 = scmp.ne.s32.totalorder %s102, %s103
      %p114 = scmp.eq.s32.totalorder %s42, 0
      %p115 = por %p113, %p114
      %p116 = scmp.ne.s32.totalorder %s102, %s103
      %p117 = scmp.eq.s32.totalorder %s43, 1
      %p118 = por %p116, %p117
      %p120 = scmp.ne.s32.totalorder %s103, %s119
      %p121 = scmp.eq.s32.totalorder %s43, 0
      %p122 = por %p120, %p121
      %s123 = ssub.s32 %s37, %s44
      %p124 = scmp.eq.s32.totalorder %s123, 0
      %s126 = sadd.s32 %s125, 1
      %s127 = scalar_select %p124, %s125, %s126
      %p130 = pneg %p124
      %p131 = scmp.eq.s32.totalorder %s37, 1
      %p132 = por %p130, %p131
      %p133 = scmp.ne.s32.totalorder %s125, %s128
      %p134 = scmp.eq.s32.totalorder %s37, 0
      %p135 = por %p133, %p134
      %p136 = scmp.ne.s32.totalorder %s125, %s128
      %p137 = scmp.eq.s32.totalorder %s42, 1
      %p138 = por %p136, %p137
      %p139 = scmp.ne.s32.totalorder %s128, %s129
      %p140 = scmp.eq.s32.totalorder %s42, 0
      %p141 = por %p139, %p140
      %p142 = scmp.ne.s32.totalorder %s128, %s129
      %p143 = scmp.eq.s32.totalorder %s43, 1
      %p144 = por %p142, %p143
      %p146 = scmp.ne.s32.totalorder %s129, %s145
      %p147 = scmp.eq.s32.totalorder %s43, 0
      %p148 = por %p146, %p147
      %s149 = ssub.s32 %s37, %s44
      %p150 = scmp.eq.s32.totalorder %s149, 0
      %s152 = sadd.s32 %s151, 1
      %s153 = scalar_select %p150, %s151, %s152
      %p156 = pneg %p150
      %p157 = scmp.eq.s32.totalorder %s37, 1
      %p158 = por %p156, %p157
      %p159 = scmp.ne.s32.totalorder %s151, %s154
      %p160 = scmp.eq.s32.totalorder %s37, 0
      %p161 = por %p159, %p160
      %p162 = scmp.ne.s32.totalorder %s151, %s154
      %p163 = scmp.eq.s32.totalorder %s42, 1
      %p164 = por %p162, %p163
      %p165 = scmp.ne.s32.totalorder %s154, %s155
      %p166 = scmp.eq.s32.totalorder %s42, 0
      %p167 = por %p165, %p166
      %p168 = scmp.ne.s32.totalorder %s154, %s155
      %p169 = scmp.eq.s32.totalorder %s43, 1
      %p170 = por %p168, %p169
      %p172 = scmp.ne.s32.totalorder %s155, %s171
      %p173 = scmp.eq.s32.totalorder %s43, 0
      %p174 = por %p172, %p173
      %s176 = sadd.s32 %s175, 1
      %p179 = scmp.eq.s32.totalorder %s37, 1
      %p180 = scmp.ne.s32.totalorder %s175, %s177
      %p181 = scmp.eq.s32.totalorder %s37, 0
      %p182 = por %p180, %p181
      %p183 = scmp.ne.s32.totalorder %s175, %s177
      %p184 = scmp.eq.s32.totalorder %s42, 1
      %p185 = por %p183, %p184
      %p186 = scmp.ne.s32.totalorder %s177, %s178
      %p187 = scmp.eq.s32.totalorder %s42, 0
      %p188 = por %p186, %p187
      %p189 = scmp.ne.s32.totalorder %s177, %s178
      %p190 = scmp.eq.s32.totalorder %s43, 1
      %p191 = por %p189, %p190
      %p193 = scmp.ne.s32.totalorder %s178, %s192
      %p194 = scmp.eq.s32.totalorder %s43, 0
      %p195 = por %p193, %p194
      %s197 = sadd.s32 %s196, 1
      %p200 = scmp.eq.s32.totalorder %s37, 1
      %p201 = scmp.ne.s32.totalorder %s196, %s198
      %p202 = scmp.eq.s32.totalorder %s37, 0
      %p203 = por %p201, %p202
      %p204 = scmp.ne.s32.totalorder %s196, %s198
      %p205 = scmp.eq.s32.totalorder %s42, 1
      %p206 = por %p204, %p205
      %p207 = scmp.ne.s32.totalorder %s198, %s199
      %p208 = scmp.eq.s32.totalorder %s42, 0
      %p209 = por %p207, %p208
      %p210 = scmp.ne.s32.totalorder %s198, %s199
      %p211 = scmp.eq.s32.totalorder %s43, 1
      %p212 = por %p210, %p211
      %p214 = scmp.ne.s32.totalorder %s199, %s213
      %p215 = scmp.eq.s32.totalorder %s43, 0
      %p216 = por %p214, %p215
      %s218 = sadd.s32 %s217, 1
      %p221 = scmp.eq.s32.totalorder %s37, 1
      %p222 = scmp.ne.s32.totalorder %s217, %s219
      %p223 = scmp.eq.s32.totalorder %s37, 0
      %p224 = por %p222, %p223
      %p225 = scmp.ne.s32.totalorder %s217, %s219
      %p226 = scmp.eq.s32.totalorder %s42, 1
      %p227 = por %p225, %p226
      %p228 = scmp.ne.s32.totalorder %s219, %s220
      %p229 = scmp.eq.s32.totalorder %s42, 0
      %p230 = por %p228, %p229
      %p231 = scmp.ne.s32.totalorder %s219, %s220
      %p232 = scmp.eq.s32.totalorder %s43, 1
      %p233 = por %p231, %p232
      %p235 = scmp.ne.s32.totalorder %s220, %s234
      %p236 = scmp.eq.s32.totalorder %s43, 0
      %p237 = por %p235, %p236
      %s239 = sadd.s32 %s238, 1
      %p242 = scmp.eq.s32.totalorder %s37, 1
      %p243 = scmp.ne.s32.totalorder %s238, %s240
      %p244 = scmp.eq.s32.totalorder %s37, 0
      %p245 = por %p243, %p244
      %p246 = scmp.ne.s32.totalorder %s238, %s240
      %p247 = scmp.eq.s32.totalorder %s42, 1
      %p248 = por %p246, %p247
      %p249 = scmp.ne.s32.totalorder %s240, %s241
      %p250 = scmp.eq.s32.totalorder %s42, 0
      %p251 = por %p249, %p250
      %p252 = scmp.ne.s32.totalorder %s240, %s241
      %p253 = scmp.eq.s32.totalorder %s43, 1
      %p254 = por %p252, %p253
      %p256 = scmp.ne.s32.totalorder %s241, %s255
      %p257 = scmp.eq.s32.totalorder %s43, 0
      %p258 = por %p256, %p257
      %s260 = sadd.s32 %s259, 1
      %p263 = scmp.eq.s32.totalorder %s37, 1
      %p264 = scmp.ne.s32.totalorder %s259, %s261
      %p265 = scmp.eq.s32.totalorder %s37, 0
      %p266 = por %p264, %p265
      %p267 = scmp.ne.s32.totalorder %s259, %s261
      %p268 = scmp.eq.s32.totalorder %s42, 1
      %p269 = por %p267, %p268
      %p270 = scmp.ne.s32.totalorder %s261, %s262
      %p271 = scmp.eq.s32.totalorder %s42, 0
      %p272 = por %p270, %p271
      %p273 = scmp.ne.s32.totalorder %s261, %s262
      %p274 = scmp.eq.s32.totalorder %s43, 1
      %p275 = por %p273, %p274
      %p277 = scmp.ne.s32.totalorder %s262, %s276
      %p278 = scmp.eq.s32.totalorder %s43, 0
      %p279 = por %p277, %p278
      %s281 = sadd.s32 %s280, 1
      %p284 = scmp.eq.s32.totalorder %s37, 1
      %p285 = scmp.ne.s32.totalorder %s280, %s282
      %p286 = scmp.eq.s32.totalorder %s37, 0
      %p287 = por %p285, %p286
      %p288 = scmp.ne.s32.totalorder %s280, %s282
      %p289 = scmp.eq.s32.totalorder %s42, 1
      %p290 = por %p288, %p289
      %p291 = scmp.ne.s32.totalorder %s282, %s283
      %p292 = scmp.eq.s32.totalorder %s42, 0
      %p293 = por %p291, %p292
      %p294 = scmp.ne.s32.totalorder %s282, %s283
      %p295 = scmp.eq.s32.totalorder %s43, 1
      %p296 = por %p294, %p295
      %p298 = scmp.ne.s32.totalorder %s283, %s297
      %p299 = scmp.eq.s32.totalorder %s43, 0
      %p300 = por %p298, %p299
      %s302 = sadd.s32 %s301, 1
      %p305 = scmp.eq.s32.totalorder %s37, 1
      %p306 = scmp.ne.s32.totalorder %s301, %s303
      %p307 = scmp.eq.s32.totalorder %s37, 0
      %p308 = por %p306, %p307
      %p309 = scmp.ne.s32.totalorder %s301, %s303
      %p310 = scmp.eq.s32.totalorder %s42, 1
      %p311 = por %p309, %p310
      %p312 = scmp.ne.s32.totalorder %s303, %s304
      %p313 = scmp.eq.s32.totalorder %s42, 0
      %p314 = por %p312, %p313
      %p315 = scmp.ne.s32.totalorder %s303, %s304
      %p316 = scmp.eq.s32.totalorder %s43, 1
      %p317 = por %p315, %p316
      %p319 = scmp.ne.s32.totalorder %s304, %s318
      %p320 = scmp.eq.s32.totalorder %s43, 0
      %p321 = por %p319, %p320
      %s323 = sadd.s32 %s322, 1
      %p326 = scmp.eq.s32.totalorder %s37, 1
      %p327 = scmp.ne.s32.totalorder %s322, %s324
      %p328 = scmp.eq.s32.totalorder %s37, 0
      %p329 = por %p327, %p328
      %p330 = scmp.ne.s32.totalorder %s322, %s324
      %p331 = scmp.eq.s32.totalorder %s42, 1
      %p332 = por %p330, %p331
      %p333 = scmp.ne.s32.totalorder %s324, %s325
      %p334 = scmp.eq.s32.totalorder %s42, 0
      %p335 = por %p333, %p334
      %p336 = scmp.ne.s32.totalorder %s324, %s325
      %p337 = scmp.eq.s32.totalorder %s43, 1
      %p338 = por %p336, %p337
      %p340 = scmp.ne.s32.totalorder %s325, %s339
      %p341 = scmp.eq.s32.totalorder %s43, 0
      %p342 = por %p340, %p341
      %s344 = sadd.s32 %s343, 1
      %p347 = scmp.eq.s32.totalorder %s37, 1
      %p348 = scmp.ne.s32.totalorder %s343, %s345
      %p349 = scmp.eq.s32.totalorder %s37, 0
      %p350 = por %p348, %p349
      %p351 = scmp.ne.s32.totalorder %s343, %s345
      %p352 = scmp.eq.s32.totalorder %s42, 1
      %p353 = por %p351, %p352
      %p354 = scmp.ne.s32.totalorder %s345, %s346
      %p355 = scmp.eq.s32.totalorder %s42, 0
      %p356 = por %p354, %p355
      %p357 = scmp.ne.s32.totalorder %s345, %s346
      %p358 = scmp.eq.s32.totalorder %s43, 1
      %p359 = por %p357, %p358
      %p361 = scmp.ne.s32.totalorder %s346, %s360
      %p362 = scmp.eq.s32.totalorder %s43, 0
      %p363 = por %p361, %p362
      %s364 = ssub.s32 %s37, %s44
      %p365 = scmp.eq.s32.totalorder %s364, 0
      %s367 = sadd.s32 %s366, 1
      %s368 = scalar_select %p365, %s366, %s367
      %p371 = pneg %p365
      %p372 = scmp.eq.s32.totalorder %s37, 1
      %p373 = por %p371, %p372
      %p374 = scmp.ne.s32.totalorder %s366, %s369
      %p375 = scmp.eq.s32.totalorder %s37, 0
      %p376 = por %p374, %p375
      %p377 = scmp.ne.s32.totalorder %s366, %s369
      %p378 = scmp.eq.s32.totalorder %s42, 1
      %p379 = por %p377, %p378
      %p380 = scmp.ne.s32.totalorder %s369, %s370
      %p381 = scmp.eq.s32.totalorder %s42, 0
      %p382 = por %p380, %p381
      %p383 = scmp.ne.s32.totalorder %s369, %s370
      %p384 = scmp.eq.s32.totalorder %s43, 1
      %p385 = por %p383, %p384
      %p387 = scmp.ne.s32.totalorder %s370, %s386
      %p388 = scmp.eq.s32.totalorder %s43, 0
      %p389 = por %p387, %p388
      %p390 = scmp.le.s32.totalorder 1, %s37
      %p391 = scmp.lt.s32.totalorder %s37, 3
      %p392 = pnand %p390, %p391
      %p393 = pneg %p392
      // Predicated region
      $region9: #{pattern_graph_conv2d_forward.1} parent=5 // pred_check
        _
      $region10: #{pattern_graph_conv2d_forward.1} parent=5 // pred_check_branch
        %395 = sbr.rel (%p392) target = $region12
      $region11: #{pattern_graph_conv2d_forward.1} parent=5 // pred_region
        %s396 = ssub.s32 %s37, 1
        // Predicated region
        $region13: #{pattern_graph_conv2d_forward.1} parent=11 // pred_check
          %p397 = pneg %p188
        $region14: #{pattern_graph_conv2d_forward.1} parent=11 // pred_check_branch
          %399 = sbr.rel (%p397) target = $region16
        $region15: #{pattern_graph_conv2d_forward.1} parent=11 // pred_region
          %s401 = ssub.s32 64, 64
          %402 = vsyncadd [#allocation12], %s401
          %s404 = sshll.u32 [#allocation11], 4
          %s405 = int_to_ptr.vmem [resolvable:$true] %s404
          %407 = dma.hbm_to_vmem [thread:$0]  %s5, 64, %s405, [#allocation12]
        $region16: #{pattern_graph_conv2d_forward.1} parent=11 // pred_fallthru
          _
        // Predicated region
        $region17: #{pattern_graph_conv2d_forward.1} parent=11 // pred_check
          %p408 = pneg %p209
        $region18: #{pattern_graph_conv2d_forward.1} parent=11 // pred_check_branch
          %410 = sbr.rel (%p408) target = $region20
        $region19: #{pattern_graph_conv2d_forward.1} parent=11 // pred_region
          %s412 = ssub.s32 16, 16
          %413 = vsyncadd [#allocation12], %s412
          %s415 = sshll.u32 [#allocation13], 4
          %s416 = int_to_ptr.vmem [resolvable:$true] %s415
          %418 = dma.hbm_to_vmem [thread:$0]  %s6, 16, %s416, [#allocation12]
        $region20: #{pattern_graph_conv2d_forward.1} parent=11 // pred_fallthru
          _
        // Predicated region
        $region21: #{pattern_graph_conv2d_forward.1} parent=11 // pred_check
          %p419 = pneg %p230
        $region22: #{pattern_graph_conv2d_forward.1} parent=11 // pred_check_branch
          %421 = sbr.rel (%p419) target = $region24
        $region23: #{pattern_graph_conv2d_forward.1} parent=11 // pred_region
          %s423 = ssub.s32 16, 16
          %424 = vsyncadd [#allocation15], %s423
          %s426 = sshll.u32 [#allocation14], 4
          %s427 = int_to_ptr.vmem [resolvable:$true] %s426
          %429 = dma.hbm_to_vmem [thread:$0]  %s7, 16, %s427, [#allocation15]
        $region24: #{pattern_graph_conv2d_forward.1} parent=11 // pred_fallthru
          _
        // Predicated region
        $region25: #{pattern_graph_conv2d_forward.1} parent=11 // pred_check
          %p430 = pneg %p251
        $region26: #{pattern_graph_conv2d_forward.1} parent=11 // pred_check_branch
          %432 = sbr.rel (%p430) target = $region28
        $region27: #{pattern_graph_conv2d_forward.1} parent=11 // pred_region
          %s434 = ssub.s32 128, 128
          %435 = vsyncadd [#allocation15], %s434
          %s437 = sshll.u32 [#allocation16], 4
          %s438 = int_to_ptr.vmem [resolvable:$true] %s437
          %440 = dma.hbm_to_vmem [thread:$0]  %s8, 128, %s438, [#allocation15]
        $region28: #{pattern_graph_conv2d_forward.1} parent=11 // pred_fallthru
          _
        // Predicated region
        $region29: #{pattern_graph_conv2d_forward.1} parent=11 // pred_check
          %p441 = pneg %p272
        $region30: #{pattern_graph_conv2d_forward.1} parent=11 // pred_check_branch
          %443 = sbr.rel (%p441) target = $region32
        $region31: #{pattern_graph_conv2d_forward.1} parent=11 // pred_region
          %s445 = ssub.s32 16, 16
          %446 = vsyncadd [#allocation18], %s445
          %s448 = sshll.u32 [#allocation17], 4
          %s449 = int_to_ptr.vmem [resolvable:$true] %s448
          %451 = dma.hbm_to_vmem [thread:$0]  %s9, 16, %s449, [#allocation18]
        $region32: #{pattern_graph_conv2d_forward.1} parent=11 // pred_fallthru
          _
        // Predicated region
        $region33: #{pattern_graph_conv2d_forward.1} parent=11 // pred_check
          %p452 = pneg %p293
        $region34: #{pattern_graph_conv2d_forward.1} parent=11 // pred_check_branch
          %454 = sbr.rel (%p452) target = $region36
        $region35: #{pattern_graph_conv2d_forward.1} parent=11 // pred_region
          %s456 = ssub.s32 16, 16
          %457 = vsyncadd [#allocation18], %s456
          %s459 = sshll.u32 [#allocation19], 4
          %s460 = int_to_ptr.vmem [resolvable:$true] %s459
          %462 = dma.hbm_to_vmem [thread:$0]  %s10, 16, %s460, [#allocation18]
        $region36: #{pattern_graph_conv2d_forward.1} parent=11 // pred_fallthru
          _
        // Predicated region
        $region37: #{pattern_graph_conv2d_forward.1} parent=11 // pred_check
          %p463 = pneg %p314
        $region38: #{pattern_graph_conv2d_forward.1} parent=11 // pred_check_branch
          %465 = sbr.rel (%p463) target = $region40
        $region39: #{pattern_graph_conv2d_forward.1} parent=11 // pred_region
          %s467 = ssub.s32 512, 512
          %468 = vsyncadd [#allocation21], %s467
          %s469 = sshll.u32 [#allocation20], 4
          %s470 = int_to_ptr.vmem [resolvable:$true] %s469
          %475 = dma.hbm_to_vmem [thread:$0]  %s11, 512, %s470, [#allocation21], 128, 128, 8
        $region40: #{pattern_graph_conv2d_forward.1} parent=11 // pred_fallthru
          _
        // Predicated region
        $region41: #{pattern_graph_conv2d_forward.1} parent=11 // pred_check
          %p476 = pneg %p335
        $region42: #{pattern_graph_conv2d_forward.1} parent=11 // pred_check_branch
          %478 = sbr.rel (%p476) target = $region44
        $region43: #{pattern_graph_conv2d_forward.1} parent=11 // pred_region
          %s480 = ssub.s32 16, 16
          %481 = vsyncadd [#allocation21], %s480
          %s483 = sshll.u32 [#allocation22], 4
          %s484 = int_to_ptr.vmem [resolvable:$true] %s483
          %486 = dma.hbm_to_vmem [thread:$0]  %s12, 16, %s484, [#allocation21]
        $region44: #{pattern_graph_conv2d_forward.1} parent=11 // pred_fallthru
          _
        // Predicated region
        $region45: #{pattern_graph_conv2d_forward.1} parent=11 // pred_check
          %p487 = pneg %p356
        $region46: #{pattern_graph_conv2d_forward.1} parent=11 // pred_check_branch
          %489 = sbr.rel (%p487) target = $region48
        $region47: #{pattern_graph_conv2d_forward.1} parent=11 // pred_region
          %s491 = ssub.s32 16, 16
          %492 = vsyncadd [#allocation24], %s491
          %s494 = sshll.u32 [#allocation23], 4
          %s495 = int_to_ptr.vmem [resolvable:$true] %s494
          %497 = dma.hbm_to_vmem [thread:$0]  %s13, 16, %s495, [#allocation24]
        $region48: #{pattern_graph_conv2d_forward.1} parent=11 // pred_fallthru
          _
      $region12: #{pattern_graph_conv2d_forward.1} parent=5 // pred_fallthru
        _
      %p498 = scmp.lt.s32.totalorder %s37, 2
      // Predicated region
      $region49: #{pattern_graph_conv2d_forward.1} parent=5 // pred_check
        %p499 = pneg %p498
      $region50: #{pattern_graph_conv2d_forward.1} parent=5 // pred_check_branch
        %501 = sbr.rel (%p499) target = $region52
      $region51: #{pattern_graph_conv2d_forward.1} parent=5 // pred_region
        // Predicated region
        $region53: #{pattern_graph_conv2d_forward.1} parent=51 // pred_check
          %p502 = pneg %p57
        $region54: #{pattern_graph_conv2d_forward.1} parent=51 // pred_check_branch
          %504 = sbr.rel (%p502) target = $region56
        $region55: #{pattern_graph_conv2d_forward.1} parent=51 // pred_region
          %s505 = sand.u32 %s47, 1
          %s506 = scalar_lea.sflag [#allocation3], %s505
          %s507 = sand.u32 %s47, 1
          %s508 = smul.addr %s507, 8
          %s509 = scalar_lea.vmem [#allocation2], %s508
          %s511 = ssub.s32 128, 128
          %512 = vsyncadd %s506, %s511
          %s513 = smul.addr %s37, 128
          %s514 = scalar_lea.hbm %s0, %s513
          %s516 = sshll.u32 %s509, 4
          %s517 = int_to_ptr.vmem [resolvable:$true] %s516
          %519 = dma.hbm_to_vmem [thread:$0]  %s514, 128, %s517, %s506
        $region56: #{pattern_graph_conv2d_forward.1} parent=51 // pred_fallthru
          _
        // Predicated region
        $region57: #{pattern_graph_conv2d_forward.1} parent=51 // pred_check
          %p520 = pneg %p83
        $region58: #{pattern_graph_conv2d_forward.1} parent=51 // pred_check_branch
          %522 = sbr.rel (%p520) target = $region60
        $region59: #{pattern_graph_conv2d_forward.1} parent=51 // pred_region
          %s523 = sand.u32 %s37, 1
          %s524 = scalar_lea.sflag [#allocation6], %s523
          %s525 = sand.u32 %s73, 1
          %s526 = smul.addr %s525, 16
          %s527 = scalar_lea.vmem [#allocation5], %s526
          %s529 = ssub.s32 256, 256
          %530 = vsyncadd %s524, %s529
          %s531 = smul.addr %s37, 2
          %s532 = smul.addr %s531, 128
          %s533 = scalar_lea.hbm %s1, %s532
          %s534 = sshll.u32 %s527, 4
          %s535 = int_to_ptr.vmem [resolvable:$true] %s534
          %540 = dma.hbm_to_vmem [thread:$0]  %s533, 256, %s535, %s524, 128, 128, 8
        $region60: #{pattern_graph_conv2d_forward.1} parent=51 // pred_fallthru
          _
        // Predicated region
        $region61: #{pattern_graph_conv2d_forward.1} parent=51 // pred_check
          %p541 = pneg %p109
        $region62: #{pattern_graph_conv2d_forward.1} parent=51 // pred_check_branch
          %543 = sbr.rel (%p541) target = $region64
        $region63: #{pattern_graph_conv2d_forward.1} parent=51 // pred_region
          %s544 = sand.u32 %s37, 1
          %s545 = scalar_lea.sflag [#allocation6], %s544
          %s546 = sand.u32 %s99, 1
          %s547 = smul.addr %s546, 8
          %s548 = scalar_lea.vmem [#allocation7], %s547
          %s550 = ssub.s32 128, 128
          %551 = vsyncadd %s545, %s550
          %s552 = smul.addr %s37, 128
          %s553 = scalar_lea.hbm %s2, %s552
          %s555 = sshll.u32 %s548, 4
          %s556 = int_to_ptr.vmem [resolvable:$true] %s555
          %558 = dma.hbm_to_vmem [thread:$0]  %s553, 128, %s556, %s545
        $region64: #{pattern_graph_conv2d_forward.1} parent=51 // pred_fallthru
          _
        // Predicated region
        $region65: #{pattern_graph_conv2d_forward.1} parent=51 // pred_check
          %p559 = pneg %p135
        $region66: #{pattern_graph_conv2d_forward.1} parent=51 // pred_check_branch
          %561 = sbr.rel (%p559) target = $region68
        $region67: #{pattern_graph_conv2d_forward.1} parent=51 // pred_region
          %s562 = sand.u32 %s37, 1
          %s563 = scalar_lea.sflag [#allocation9], %s562
          %s564 = sand.u32 %s125, 1
          %s565 = smul.addr %s564, 16
          %s566 = scalar_lea.vmem [#allocation8], %s565
          %s568 = ssub.s32 256, 256
          %569 = vsyncadd %s563, %s568
          %s570 = smul.addr %s37, 2
          %s571 = smul.addr %s570, 128
          %s572 = scalar_lea.hbm %s3, %s571
          %s573 = sshll.u32 %s566, 4
          %s574 = int_to_ptr.vmem [resolvable:$true] %s573
          %579 = dma.hbm_to_vmem [thread:$0]  %s572, 256, %s574, %s563, 128, 128, 8
        $region68: #{pattern_graph_conv2d_forward.1} parent=51 // pred_fallthru
          _
        // Predicated region
        $region69: #{pattern_graph_conv2d_forward.1} parent=51 // pred_check
          %p580 = pneg %p161
        $region70: #{pattern_graph_conv2d_forward.1} parent=51 // pred_check_branch
          %582 = sbr.rel (%p580) target = $region72
        $region71: #{pattern_graph_conv2d_forward.1} parent=51 // pred_region
          %s583 = sand.u32 %s37, 1
          %s584 = scalar_lea.sflag [#allocation9], %s583
          %s585 = sand.u32 %s151, 1
          %s586 = smul.addr %s585, 8
          %s587 = scalar_lea.vmem [#allocation10], %s586
          %s589 = ssub.s32 128, 128
          %590 = vsyncadd %s584, %s589
          %s591 = smul.addr %s37, 128
          %s592 = scalar_lea.hbm %s4, %s591
          %s594 = sshll.u32 %s587, 4
          %s595 = int_to_ptr.vmem [resolvable:$true] %s594
          %597 = dma.hbm_to_vmem [thread:$0]  %s592, 128, %s595, %s584
        $region72: #{pattern_graph_conv2d_forward.1} parent=51 // pred_fallthru
          _
      $region52: #{pattern_graph_conv2d_forward.1} parent=5 // pred_fallthru
        _
      %p598 = scmp.le.s32.totalorder 1, %s37
      %p599 = scmp.lt.s32.totalorder %s37, 3
      %p600 = pnand %p598, %p599
      %p601 = pneg %p600
      // Predicated region
      $region73: #{pattern_graph_conv2d_forward.1} parent=5 // pred_check
        _
      $region74: #{pattern_graph_conv2d_forward.1} parent=5 // pred_check_branch
        %603 = sbr.rel (%p600) target = $region76
      $region75: #{pattern_graph_conv2d_forward.1} parent=5 // pred_region
        %s604 = ssub.s32 %s37, 1
        %s605 = sand.u32 %s50, 1
        %s606 = scalar_lea.sflag [#allocation3], %s605
        %s607 = sand.u32 %s50, 1
        %s608 = smul.addr %s607, 8
        %s609 = scalar_lea.vmem [#allocation2], %s608
        // Predicated region
        $region77: #{pattern_graph_conv2d_forward.1} parent=75 // pred_check
          %p610 = pneg %p63
        $region78: #{pattern_graph_conv2d_forward.1} parent=75 // pred_check_branch
          %612 = sbr.rel (%p610) target = $region80
        $region79: #{pattern_graph_conv2d_forward.1} parent=75 // pred_region
          %613 = dma.done %s606, 128
        $region80: #{pattern_graph_conv2d_forward.1} parent=75 // pred_fallthru
          _
        %s614 = sand.u32 %s42, 1
        %s615 = scalar_lea.sflag [#allocation6], %s614
        %s616 = sand.u32 %s76, 1
        %s617 = smul.addr %s616, 16
        %s618 = scalar_lea.vmem [#allocation5], %s617
        // Predicated region
        $region81: #{pattern_graph_conv2d_forward.1} parent=75 // pred_check
          %p619 = pneg %p89
        $region82: #{pattern_graph_conv2d_forward.1} parent=75 // pred_check_branch
          %621 = sbr.rel (%p619) target = $region84
        $region83: #{pattern_graph_conv2d_forward.1} parent=75 // pred_region
          %622 = dma.done %s615, 256
        $region84: #{pattern_graph_conv2d_forward.1} parent=75 // pred_fallthru
          _
        %s623 = sand.u32 %s42, 1
        %s624 = scalar_lea.sflag [#allocation6], %s623
        %s625 = sand.u32 %s102, 1
        %s626 = smul.addr %s625, 8
        %s627 = scalar_lea.vmem [#allocation7], %s626
        // Predicated region
        $region85: #{pattern_graph_conv2d_forward.1} parent=75 // pred_check
          %p628 = pneg %p115
        $region86: #{pattern_graph_conv2d_forward.1} parent=75 // pred_check_branch
          %630 = sbr.rel (%p628) target = $region88
        $region87: #{pattern_graph_conv2d_forward.1} parent=75 // pred_region
          %631 = dma.done %s624, 128
        $region88: #{pattern_graph_conv2d_forward.1} parent=75 // pred_fallthru
          _
        %s632 = sand.u32 %s42, 1
        %s633 = scalar_lea.sflag [#allocation9], %s632
        %s634 = sand.u32 %s128, 1
        %s635 = smul.addr %s634, 16
        %s636 = scalar_lea.vmem [#allocation8], %s635
        // Predicated region
        $region89: #{pattern_graph_conv2d_forward.1} parent=75 // pred_check
          %p637 = pneg %p141
        $region90: #{pattern_graph_conv2d_forward.1} parent=75 // pred_check_branch
          %639 = sbr.rel (%p637) target = $region92
        $region91: #{pattern_graph_conv2d_forward.1} parent=75 // pred_region
          %640 = dma.done %s633, 256
        $region92: #{pattern_graph_conv2d_forward.1} parent=75 // pred_fallthru
          _
        %s641 = sand.u32 %s42, 1
        %s642 = scalar_lea.sflag [#allocation9], %s641
        %s643 = sand.u32 %s154, 1
        %s644 = smul.addr %s643, 8
        %s645 = scalar_lea.vmem [#allocation10], %s644
        // Predicated region
        $region93: #{pattern_graph_conv2d_forward.1} parent=75 // pred_check
          %p646 = pneg %p167
        $region94: #{pattern_graph_conv2d_forward.1} parent=75 // pred_check_branch
          %648 = sbr.rel (%p646) target = $region96
        $region95: #{pattern_graph_conv2d_forward.1} parent=75 // pred_region
          %649 = dma.done %s642, 128
        $region96: #{pattern_graph_conv2d_forward.1} parent=75 // pred_fallthru
          _
        // Predicated region
        $region97: #{pattern_graph_conv2d_forward.1} parent=75 // pred_check
          %p650 = pneg %p188
        $region98: #{pattern_graph_conv2d_forward.1} parent=75 // pred_check_branch
          %652 = sbr.rel (%p650) target = $region100
        $region99: #{pattern_graph_conv2d_forward.1} parent=75 // pred_region
          %653 = dma.done [#allocation12], 64
        $region100: #{pattern_graph_conv2d_forward.1} parent=75 // pred_fallthru
          _
        // Predicated region
        $region101: #{pattern_graph_conv2d_forward.1} parent=75 // pred_check
          %p654 = pneg %p209
        $region102: #{pattern_graph_conv2d_forward.1} parent=75 // pred_check_branch
          %656 = sbr.rel (%p654) target = $region104
        $region103: #{pattern_graph_conv2d_forward.1} parent=75 // pred_region
          %657 = dma.done [#allocation12], 16
        $region104: #{pattern_graph_conv2d_forward.1} parent=75 // pred_fallthru
          _
        // Predicated region
        $region105: #{pattern_graph_conv2d_forward.1} parent=75 // pred_check
          %p658 = pneg %p230
        $region106: #{pattern_graph_conv2d_forward.1} parent=75 // pred_check_branch
          %660 = sbr.rel (%p658) target = $region108
        $region107: #{pattern_graph_conv2d_forward.1} parent=75 // pred_region
          %661 = dma.done [#allocation15], 16
        $region108: #{pattern_graph_conv2d_forward.1} parent=75 // pred_fallthru
          _
        // Predicated region
        $region109: #{pattern_graph_conv2d_forward.1} parent=75 // pred_check
          %p662 = pneg %p251
        $region110: #{pattern_graph_conv2d_forward.1} parent=75 // pred_check_branch
          %664 = sbr.rel (%p662) target = $region112
        $region111: #{pattern_graph_conv2d_forward.1} parent=75 // pred_region
          %665 = dma.done [#allocation15], 128
        $region112: #{pattern_graph_conv2d_forward.1} parent=75 // pred_fallthru
          _
        // Predicated region
        $region113: #{pattern_graph_conv2d_forward.1} parent=75 // pred_check
          %p666 = pneg %p272
        $region114: #{pattern_graph_conv2d_forward.1} parent=75 // pred_check_branch
          %668 = sbr.rel (%p666) target = $region116
        $region115: #{pattern_graph_conv2d_forward.1} parent=75 // pred_region
          %669 = dma.done [#allocation18], 16
        $region116: #{pattern_graph_conv2d_forward.1} parent=75 // pred_fallthru
          _
        // Predicated region
        $region117: #{pattern_graph_conv2d_forward.1} parent=75 // pred_check
          %p670 = pneg %p293
        $region118: #{pattern_graph_conv2d_forward.1} parent=75 // pred_check_branch
          %672 = sbr.rel (%p670) target = $region120
        $region119: #{pattern_graph_conv2d_forward.1} parent=75 // pred_region
          %673 = dma.done [#allocation18], 16
        $region120: #{pattern_graph_conv2d_forward.1} parent=75 // pred_fallthru
          _
        // Predicated region
        $region121: #{pattern_graph_conv2d_forward.1} parent=75 // pred_check
          %p674 = pneg %p314
        $region122: #{pattern_graph_conv2d_forward.1} parent=75 // pred_check_branch
          %676 = sbr.rel (%p674) target = $region124
        $region123: #{pattern_graph_conv2d_forward.1} parent=75 // pred_region
          %677 = dma.done [#allocation21], 512
        $region124: #{pattern_graph_conv2d_forward.1} parent=75 // pred_fallthru
          _
        // Predicated region
        $region125: #{pattern_graph_conv2d_forward.1} parent=75 // pred_check
          %p678 = pneg %p335
        $region126: #{pattern_graph_conv2d_forward.1} parent=75 // pred_check_branch
          %680 = sbr.rel (%p678) target = $region128
        $region127: #{pattern_graph_conv2d_forward.1} parent=75 // pred_region
          %681 = dma.done [#allocation21], 16
        $region128: #{pattern_graph_conv2d_forward.1} parent=75 // pred_fallthru
          _
        // Predicated region
        $region129: #{pattern_graph_conv2d_forward.1} parent=75 // pred_check
          %p682 = pneg %p356
        $region130: #{pattern_graph_conv2d_forward.1} parent=75 // pred_check_branch
          %684 = sbr.rel (%p682) target = $region132
        $region131: #{pattern_graph_conv2d_forward.1} parent=75 // pred_region
          %685 = dma.done [#allocation24], 16
        $region132: #{pattern_graph_conv2d_forward.1} parent=75 // pred_fallthru
          _
        %s686 = sand.u32 %s50, 1
        %s687 = scalar_lea.sflag [#allocation3], %s686
        %s688 = sand.u32 %s50, 1
        %s689 = smul.addr %s688, 8
        %s690 = scalar_lea.vmem [#allocation2], %s689
        %p691 = pneg %p63
        %p692 = pneg %p60
        %s693 = sand.u32 %s42, 1
        %s694 = scalar_lea.sflag [#allocation6], %s693
        %s695 = sand.u32 %s76, 1
        %s696 = smul.addr %s695, 16
        %s697 = scalar_lea.vmem [#allocation5], %s696
        %p698 = pneg %p89
        %p699 = pneg %p86
        %s700 = sand.u32 %s42, 1
        %s701 = scalar_lea.sflag [#allocation6], %s700
        %s702 = sand.u32 %s102, 1
        %s703 = smul.addr %s702, 8
        %s704 = scalar_lea.vmem [#allocation7], %s703
        %p705 = pneg %p115
        %p706 = pneg %p112
        %s707 = sand.u32 %s42, 1
        %s708 = scalar_lea.sflag [#allocation9], %s707
        %s709 = sand.u32 %s128, 1
        %s710 = smul.addr %s709, 16
        %s711 = scalar_lea.vmem [#allocation8], %s710
        %p712 = pneg %p141
        %p713 = pneg %p138
        %s714 = sand.u32 %s42, 1
        %s715 = scalar_lea.sflag [#allocation9], %s714
        %s716 = sand.u32 %s154, 1
        %s717 = smul.addr %s716, 8
        %s718 = scalar_lea.vmem [#allocation10], %s717
        %p719 = pneg %p167
        %p720 = pneg %p164
        %p721 = pneg %p188
        %p722 = pneg %p185
        %p723 = pneg %p209
        %p724 = pneg %p206
        %p725 = pneg %p230
        %p726 = pneg %p227
        %p727 = pneg %p251
        %p728 = pneg %p248
        %p729 = pneg %p272
        %p730 = pneg %p269
        %p731 = pneg %p293
        %p732 = pneg %p290
        %p733 = pneg %p314
        %p734 = pneg %p311
        %p735 = pneg %p335
        %p736 = pneg %p332
        %p737 = pneg %p356
        %p738 = pneg %p353
        %p739 = pneg %p382
        %p740 = pneg %p379
        %s741 = sand.u32 %s369, 1
        %s742 = scalar_lea.sflag [#allocation4], %s741
        %s743 = sand.u32 %s369, 1
        %s744 = smul.addr %s743, 8
        %s745 = scalar_lea.vmem [#allocation25], %s744
        %v746 = vlaneseq
        %v747 = vshrl.u32 %v746, 7
        %v748 = vlaneseq
        %v749 = vand.u32 %v748, 127
        %vm750 = vcmp.eq.s32.totalorder %v747, %v749
        %v751 = vadd.s32 %v747, 8
        %vm752 = vcmp.eq.s32.totalorder %v751, %v749
        %v753 = vld [vmem:[%s645] sm:$0xff]
        %v754 = vld [vmem:[%s618] sm:$0xff]
        %v755 = vld [vmem:[%s618 + $0x8] sm:$0xff]
        %v756 = vld [vmem:[%s627] sm:$0xff]
        %v757 = vld [vmem:[#allocation13] sm:$0x1]
        %v759 = vlaneseq
        %v760 = vshrl.u32 %v759, 7
        %v761 = vsub.s32 0, %v760
        %v762 = vrot.slane %v757, %v761
        %v764 = vmul.f32 %v754, %v762
        %v765 = vmul.f32 %v755, %v762
        %vm766 = vcmask 48128
        %v767 = vsel %vm766, %v764, 0.0
        %768 = vadd.xlane.f32.xlu0 %v767
        %v769 = vpop.xlane.xlu0 %768
        %v770 = vsel %vm766, %v765, 0.0
        %771 = vadd.xlane.f32.xlu0 %v770
        %v772 = vpop.xlane.xlu0 %771
        %v775 = vlaneseq
        %v776 = vshrl.u32 %v775, 7
        %v777 = vsub.s32 %v749, %v776
        %v778 = vrot.slane %v769, %v777
        %v779 = vadd.s32 %v749, 4294967288
        %v780 = vlaneseq
        %v781 = vshrl.u32 %v780, 7
        %v782 = vsub.s32 %v779, %v781
        %v783 = vrot.slane %v772, %v782
        %vm784 = vcmask 130112
        %v785 = vsel %vm784, %v783, %v778
        %vm786 = vcmask 1042434
        %v787 = vsel %vm786, %v785, %v785
        %vm788 = vcmask 1043459
        %v789 = vsel %vm788, %v785, %v787
        %vm790 = vcmask 1044484
        %v791 = vsel %vm790, %v785, %v789
        %vm792 = vcmask 1045509
        %v793 = vsel %vm792, %v785, %v791
        %vm794 = vcmask 1046534
        %v795 = vsel %vm794, %v785, %v793
        %vm796 = vcmask 1047559
        %v797 = vsel %vm796, %v785, %v795
        %v799 = vmul.f32 %v753, %v797
        %vm800 = vcmask 130048
        %v802 = vsel %vm800, %v799, 0
        %v805 = vsel %vm800, %v753, 0
        %807 = vmatprep.subr.mxu0 0.0
        %808 = vmatpush1.xpose.msra.mxu0 %v805
        %809 = vmatprep.subr.mxu0 0.0
        %810 = vmatpush1.xpose.msra.mxu0 0.0
        %811 = vmatprep.subr.mxu0 0.0
        %812 = vmatpush1.xpose.msra.mxu0 0.0
        %813 = vmatprep.subr.mxu0 0.0
        %814 = vmatpush1.xpose.msra.mxu0 0.0
        %815 = vmatprep.subr.mxu0 0.0
        %816 = vmatpush1.xpose.msra.mxu0 0.0
        %817 = vmatprep.subr.mxu0 0.0
        %818 = vmatpush1.xpose.msra.mxu0 0.0
        %819 = vmatprep.subr.mxu0 0.0
        %820 = vmatpush1.xpose.msra.mxu0 0.0
        %821 = vmatprep.subr.mxu0 0.0
        %822 = vmatpush1.xpose.msra.mxu0 0.0
        %823 = vmatprep.subr.mxu0 0.0
        %824 = vmatpush1.xpose.msra.mxu0 0.0
        %825 = vmatprep.subr.mxu0 0.0
        %826 = vmatpush1.xpose.msra.mxu0 0.0
        %827 = vmatprep.subr.mxu0 0.0
        %828 = vmatpush1.xpose.msra.mxu0 0.0
        %829 = vmatprep.subr.mxu0 0.0
        %830 = vmatpush1.xpose.msra.mxu0 0.0
        %831 = vmatprep.subr.mxu0 0.0
        %832 = vmatpush1.xpose.msra.mxu0 0.0
        %833 = vmatprep.subr.mxu0 0.0
        %834 = vmatpush1.xpose.msra.mxu0 0.0
        %835 = vmatprep.subr.mxu0 0.0
        %836 = vmatpush1.xpose.msra.mxu0 0.0
        %837 = vmatprep.subr.mxu0 0.0
        %838 = vmatpush1.xpose.msra.mxu0 0.0
        %839 = vmatprep.subr.mxu0 0.0
        %840 = vmatpush1.xpose.msra.mxu0 0.0
        %841 = vmatprep.subr.mxu0 0.0
        %842 = vmatpush1.xpose.msra.mxu0 0.0
        %843 = vmatprep.subr.mxu0 0.0
        %844 = vmatpush1.xpose.msra.mxu0 0.0
        %845 = vmatprep.subr.mxu0 0.0
        %846 = vmatpush1.xpose.msra.mxu0 0.0
        %847 = vmatprep.subr.mxu0 0.0
        %848 = vmatpush1.xpose.msra.mxu0 0.0
        %849 = vmatprep.subr.mxu0 0.0
        %850 = vmatpush1.xpose.msra.mxu0 0.0
        %851 = vmatprep.subr.mxu0 0.0
        %852 = vmatpush1.xpose.msra.mxu0 0.0
        %853 = vmatprep.subr.mxu0 0.0
        %854 = vmatpush1.xpose.msra.mxu0 0.0
        %855 = vmatprep.subr.mxu0 0.0
        %856 = vmatpush1.xpose.msra.mxu0 0.0
        %857 = vmatprep.subr.mxu0 0.0
        %858 = vmatpush1.xpose.msra.mxu0 0.0
        %859 = vmatprep.subr.mxu0 0.0
        %860 = vmatpush1.xpose.msra.mxu0 0.0
        %861 = vmatprep.subr.mxu0 0.0
        %862 = vmatpush1.xpose.msra.mxu0 0.0
        %863 = vmatprep.subr.mxu0 0.0
        %864 = vmatpush1.xpose.msra.mxu0 0.0
        %865 = vmatprep.subr.mxu0 0.0
        %866 = vmatpush1.xpose.msra.mxu0 0.0
        %867 = vmatprep.subr.mxu0 0.0
        %868 = vmatpush1.xpose.msra.mxu0 0.0
        %869 = vmatprep.subr.mxu0 0.0
        %870 = vmatpush1.xpose.msra.mxu0 0.0
        %871 = vmatprep.mubr.f32.mxu0 0.0
        %872 = vmatmul.mubr.f32.gmra.mrb[0].mxu0 %v802
        %v873 = vpop.f32.mrb[0].mxu0
        %v874 = vadd.f32 0.0, %v873
        %v875 = vpop.f32.mrb[0].mxu0
        %876 = vdwg.mxu0
        %v877 = vsel %vm750, 1.0, %v874
        %v878 = vmul.f32 %v756, %v877
        %v879 = vld [vmem:[%s609] sm:$0xff]
        %v880 = vld [vmem:[#allocation11] sm:$0xf]
        %vm881 = vcmask 31744
        %v883 = vsel %vm881, %v879, 0
        %vm885 = vcmask 1043456
        %v887 = vsel %vm885, %v880, 0
        %889 = vmatprep.subr.mxu0 0.0
        %890 = vmatpush1.msra.mxu0 %v887
        %891 = vmatprep.subr.mxu0 0.0
        %892 = vmatpush1.msra.mxu0 0.0
        %893 = vmatprep.subr.mxu0 0.0
        %894 = vmatpush1.msra.mxu0 0.0
        %895 = vmatprep.subr.mxu0 0.0
        %896 = vmatpush1.msra.mxu0 0.0
        %897 = vmatprep.subr.mxu0 0.0
        %898 = vmatpush1.msra.mxu0 0.0
        %899 = vmatprep.subr.mxu0 0.0
        %900 = vmatpush1.msra.mxu0 0.0
        %901 = vmatprep.subr.mxu0 0.0
        %902 = vmatpush1.msra.mxu0 0.0
        %903 = vmatprep.subr.mxu0 0.0
        %904 = vmatpush1.msra.mxu0 0.0
        %905 = vmatprep.subr.mxu0 0.0
        %906 = vmatpush1.msra.mxu0 0.0
        %907 = vmatprep.subr.mxu0 0.0
        %908 = vmatpush1.msra.mxu0 0.0
        %909 = vmatprep.subr.mxu0 0.0
        %910 = vmatpush1.msra.mxu0 0.0
        %911 = vmatprep.subr.mxu0 0.0
        %912 = vmatpush1.msra.mxu0 0.0
        %913 = vmatprep.subr.mxu0 0.0
        %914 = vmatpush1.msra.mxu0 0.0
        %915 = vmatprep.subr.mxu0 0.0
        %916 = vmatpush1.msra.mxu0 0.0
        %917 = vmatprep.subr.mxu0 0.0
        %918 = vmatpush1.msra.mxu0 0.0
        %919 = vmatprep.subr.mxu0 0.0
        %920 = vmatpush1.msra.mxu0 0.0
        %921 = vmatprep.subr.mxu0 0.0
        %922 = vmatpush1.msra.mxu0 0.0
        %923 = vmatprep.subr.mxu0 0.0
        %924 = vmatpush1.msra.mxu0 0.0
        %925 = vmatprep.subr.mxu0 0.0
        %926 = vmatpush1.msra.mxu0 0.0
        %927 = vmatprep.subr.mxu0 0.0
        %928 = vmatpush1.msra.mxu0 0.0
        %929 = vmatprep.subr.mxu0 0.0
        %930 = vmatpush1.msra.mxu0 0.0
        %931 = vmatprep.subr.mxu0 0.0
        %932 = vmatpush1.msra.mxu0 0.0
        %933 = vmatprep.subr.mxu0 0.0
        %934 = vmatpush1.msra.mxu0 0.0
        %935 = vmatprep.subr.mxu0 0.0
        %936 = vmatpush1.msra.mxu0 0.0
        %937 = vmatprep.subr.mxu0 0.0
        %938 = vmatpush1.msra.mxu0 0.0
        %939 = vmatprep.subr.mxu0 0.0
        %940 = vmatpush1.msra.mxu0 0.0
        %941 = vmatprep.subr.mxu0 0.0
        %942 = vmatpush1.msra.mxu0 0.0
        %943 = vmatprep.subr.mxu0 0.0
        %944 = vmatpush1.msra.mxu0 0.0
        %945 = vmatprep.subr.mxu0 0.0
        %946 = vmatpush1.msra.mxu0 0.0
        %947 = vmatprep.subr.mxu0 0.0
        %948 = vmatpush1.msra.mxu0 0.0
        %949 = vmatprep.subr.mxu0 0.0
        %950 = vmatpush1.msra.mxu0 0.0
        %951 = vmatprep.subr.mxu0 0.0
        %952 = vmatpush1.msra.mxu0 0.0
        %953 = vmatprep.mubr.f32.mxu0 0.0
        %954 = vmatmul.mubr.f32.gmra.mrb[0].mxu0 %v883
        %v955 = vpop.f32.mrb[0].mxu0
        %v956 = vadd.f32 0.0, %v955
        %v957 = vpop.f32.mrb[0].mxu0
        %958 = vdwg.mxu0
        %v959 = vld [vmem:[#allocation14] sm:$0x1]
        %v961 = vlaneseq
        %v962 = vshrl.u32 %v961, 7
        %v963 = vsub.s32 0, %v962
        %v964 = vrot.slane %v959, %v963
        %vm966 = vcmask 64512
        %v968 = vsel %vm966, %v878, 0
        %970 = vmatprep.subr.mxu0 0.0
        %971 = vmatpush1.msra.mxu0 %v956
        %972 = vmatprep.subr.mxu0 0.0
        %973 = vmatpush1.msra.mxu0 0.0
        %974 = vmatprep.subr.mxu0 0.0
        %975 = vmatpush1.msra.mxu0 0.0
        %976 = vmatprep.subr.mxu0 0.0
        %977 = vmatpush1.msra.mxu0 0.0
        %978 = vmatprep.subr.mxu0 0.0
        %979 = vmatpush1.msra.mxu0 0.0
        %980 = vmatprep.subr.mxu0 0.0
        %981 = vmatpush1.msra.mxu0 0.0
        %982 = vmatprep.subr.mxu0 0.0
        %983 = vmatpush1.msra.mxu0 0.0
        %984 = vmatprep.subr.mxu0 0.0
        %985 = vmatpush1.msra.mxu0 0.0
        %986 = vmatprep.subr.mxu0 0.0
        %987 = vmatpush1.msra.mxu0 0.0
        %988 = vmatprep.subr.mxu0 0.0
        %989 = vmatpush1.msra.mxu0 0.0
        %990 = vmatprep.subr.mxu0 0.0
        %991 = vmatpush1.msra.mxu0 0.0
        %992 = vmatprep.subr.mxu0 0.0
        %993 = vmatpush1.msra.mxu0 0.0
        %994 = vmatprep.subr.mxu0 0.0
        %995 = vmatpush1.msra.mxu0 0.0
        %996 = vmatprep.subr.mxu0 0.0
        %997 = vmatpush1.msra.mxu0 0.0
        %998 = vmatprep.subr.mxu0 0.0
        %999 = vmatpush1.msra.mxu0 0.0
        %1000 = vmatprep.subr.mxu0 0.0
        %1001 = vmatpush1.msra.mxu0 0.0
        %1002 = vmatprep.subr.mxu0 0.0
        %1003 = vmatpush1.msra.mxu0 0.0
        %1004 = vmatprep.subr.mxu0 0.0
        %1005 = vmatpush1.msra.mxu0 0.0
        %1006 = vmatprep.subr.mxu0 0.0
        %1007 = vmatpush1.msra.mxu0 0.0
        %1008 = vmatprep.subr.mxu0 0.0
        %1009 = vmatpush1.msra.mxu0 0.0
        %1010 = vmatprep.subr.mxu0 0.0
        %1011 = vmatpush1.msra.mxu0 0.0
        %1012 = vmatprep.subr.mxu0 0.0
        %1013 = vmatpush1.msra.mxu0 0.0
        %1014 = vmatprep.subr.mxu0 0.0
        %1015 = vmatpush1.msra.mxu0 0.0
        %1016 = vmatprep.subr.mxu0 0.0
        %1017 = vmatpush1.msra.mxu0 0.0
        %1018 = vmatprep.subr.mxu0 0.0
        %1019 = vmatpush1.msra.mxu0 0.0
        %1020 = vmatprep.subr.mxu0 0.0
        %1021 = vmatpush1.msra.mxu0 0.0
        %1022 = vmatprep.subr.mxu0 0.0
        %1023 = vmatpush1.msra.mxu0 0.0
        %1024 = vmatprep.subr.mxu0 0.0
        %1025 = vmatpush1.msra.mxu0 0.0
        %1026 = vmatprep.subr.mxu0 0.0
        %1027 = vmatpush1.msra.mxu0 0.0
        %1028 = vmatprep.subr.mxu0 0.0
        %1029 = vmatpush1.msra.mxu0 0.0
        %1030 = vmatprep.subr.mxu0 0.0
        %1031 = vmatpush1.msra.mxu0 0.0
        %1032 = vmatprep.subr.mxu0 0.0
        %1033 = vmatpush1.msra.mxu0 0.0
        %1034 = vmatprep.mubr.f32.mxu0 0.0
        %1035 = vmatmul.mubr.f32.gmra.mrb[0].mxu0 %v968
        %v1036 = vpop.f32.mrb[0].mxu0
        %v1037 = vadd.f32 %v964, %v1036
        %v1038 = vpop.f32.mrb[0].mxu0
        %1039 = vdwg.mxu0
        %v1040 = vmax.f32 %v1037, 0.0
        %v1041 = vld [vmem:[#allocation17] sm:$0x1]
        %v1043 = vlaneseq
        %v1044 = vshrl.u32 %v1043, 7
        %v1045 = vsub.s32 0, %v1044
        %v1046 = vrot.slane %v1041, %v1045
        %v1048 = vmul.f32 %v1040, %v1046
        %vm1049 = vcmask 261120
        %v1050 = vsel %vm1049, %v1048, 0.0
        %1051 = vadd.xlane.f32.xlu0 %v1050
        %v1052 = vpop.xlane.xlu0 %1051
        %v1053 = vmul.f32 %v753, %v1052
        %1054 = vxpose.xlu0.b32.start [1/16] %v1053, 128
        %1055 = vxpose.xlu0.b32.cont [2/16] 0.0, 128
        %1056 = vxpose.xlu0.b32.cont [3/16] 0.0, 128
        %1057 = vxpose.xlu0.b32.cont [4/16] 0.0, 128
        %1058 = vxpose.xlu0.b32.cont [5/16] 0.0, 128
        %1059 = vxpose.xlu0.b32.cont [6/16] 0.0, 128
        %1060 = vxpose.xlu0.b32.cont [7/16] 0.0, 128
        %1061 = vxpose.xlu0.b32.cont [8/16] 0.0, 128
        %1062 = vxpose.xlu0.b32.cont [9/16] 0.0, 128
        %1063 = vxpose.xlu0.b32.cont [10/16] 0.0, 128
        %1064 = vxpose.xlu0.b32.cont [11/16] 0.0, 128
        %1065 = vxpose.xlu0.b32.cont [12/16] 0.0, 128
        %1066 = vxpose.xlu0.b32.cont [13/16] 0.0, 128
        %1067 = vxpose.xlu0.b32.cont [14/16] 0.0, 128
        %1068 = vxpose.xlu0.b32.cont [15/16] 0.0, 128
        %1069 = vxpose.xlu0.b32.end [16/16] 0.0, 128
        %v1070 = vpop.trf.xlu0
        %v1071 = vpop.trf.xlu0
        %v1072 = vpop.trf.xlu0
        %v1073 = vpop.trf.xlu0
        %v1074 = vpop.trf.xlu0
        %v1075 = vpop.trf.xlu0
        %v1076 = vpop.trf.xlu0
        %v1077 = vpop.trf.xlu0
        %v1078 = vpop.trf.xlu0
        %v1079 = vpop.trf.xlu0
        %v1080 = vpop.trf.xlu0
        %v1081 = vpop.trf.xlu0
        %v1082 = vpop.trf.xlu0
        %v1083 = vpop.trf.xlu0
        %v1084 = vpop.trf.xlu0
        %v1085 = vpop.trf.xlu0
        %v1087 = vsel %vm966, %v1070, 0
        %v1090 = vsel %vm966, %v1071, 0
        %1092 = vmatprep.subr.mxu0 0.0
        %1093 = vmatpush1.msra.mxu0 %v753
        %1094 = vmatprep.subr.mxu0 0.0
        %1095 = vmatpush1.msra.mxu0 0.0
        %1096 = vmatprep.subr.mxu0 0.0
        %1097 = vmatpush1.msra.mxu0 0.0
        %1098 = vmatprep.subr.mxu0 0.0
        %1099 = vmatpush1.msra.mxu0 0.0
        %1100 = vmatprep.subr.mxu0 0.0
        %1101 = vmatpush1.msra.mxu0 0.0
        %1102 = vmatprep.subr.mxu0 0.0
        %1103 = vmatpush1.msra.mxu0 0.0
        %1104 = vmatprep.subr.mxu0 0.0
        %1105 = vmatpush1.msra.mxu0 0.0
        %1106 = vmatprep.subr.mxu0 0.0
        %1107 = vmatpush1.msra.mxu0 0.0
        %1108 = vmatprep.subr.mxu0 0.0
        %1109 = vmatpush1.msra.mxu0 0.0
        %1110 = vmatprep.subr.mxu0 0.0
        %1111 = vmatpush1.msra.mxu0 0.0
        %1112 = vmatprep.subr.mxu0 0.0
        %1113 = vmatpush1.msra.mxu0 0.0
        %1114 = vmatprep.subr.mxu0 0.0
        %1115 = vmatpush1.msra.mxu0 0.0
        %1116 = vmatprep.subr.mxu0 0.0
        %1117 = vmatpush1.msra.mxu0 0.0
        %1118 = vmatprep.subr.mxu0 0.0
        %1119 = vmatpush1.msra.mxu0 0.0
        %1120 = vmatprep.subr.mxu0 0.0
        %1121 = vmatpush1.msra.mxu0 0.0
        %1122 = vmatprep.subr.mxu0 0.0
        %1123 = vmatpush1.msra.mxu0 0.0
        %1124 = vmatprep.subr.mxu0 0.0
        %1125 = vmatpush1.msra.mxu0 0.0
        %1126 = vmatprep.subr.mxu0 0.0
        %1127 = vmatpush1.msra.mxu0 0.0
        %1128 = vmatprep.subr.mxu0 0.0
        %1129 = vmatpush1.msra.mxu0 0.0
        %1130 = vmatprep.subr.mxu0 0.0
        %1131 = vmatpush1.msra.mxu0 0.0
        %1132 = vmatprep.subr.mxu0 0.0
        %1133 = vmatpush1.msra.mxu0 0.0
        %1134 = vmatprep.subr.mxu0 0.0
        %1135 = vmatpush1.msra.mxu0 0.0
        %1136 = vmatprep.subr.mxu0 0.0
        %1137 = vmatpush1.msra.mxu0 0.0
        %1138 = vmatprep.subr.mxu0 0.0
        %1139 = vmatpush1.msra.mxu0 0.0
        %1140 = vmatprep.subr.mxu0 0.0
        %1141 = vmatpush1.msra.mxu0 0.0
        %1142 = vmatprep.subr.mxu0 0.0
        %1143 = vmatpush1.msra.mxu0 0.0
        %1144 = vmatprep.subr.mxu0 0.0
        %1145 = vmatpush1.msra.mxu0 0.0
        %1146 = vmatprep.subr.mxu0 0.0
        %1147 = vmatpush1.msra.mxu0 0.0
        %1148 = vmatprep.subr.mxu0 0.0
        %1149 = vmatpush1.msra.mxu0 0.0
        %1150 = vmatprep.subr.mxu0 0.0
        %1151 = vmatpush1.msra.mxu0 0.0
        %1152 = vmatprep.subr.mxu0 0.0
        %1153 = vmatpush1.msra.mxu0 0.0
        %1154 = vmatprep.subr.mxu0 0.0
        %1155 = vmatpush1.msra.mxu0 0.0
        %1156 = vmatprep.mubr.f32.mxu0 0.0
        %1157 = vmatmul.mubr.f32.gmra.mrb[0].mxu0 %v1087
        %v1158 = vpop.f32.mrb[0].mxu0
        %v1159 = vadd.f32 0.0, %v1158
        %v1160 = vpop.f32.mrb[0].mxu0
        %1161 = vmatprep.mubr.f32.mxu0 0.0
        %1162 = vmatmul.mubr.f32.gmra.mrb[0].mxu0 %v1090
        %v1163 = vpop.f32.mrb[0].mxu0
        %v1164 = vadd.f32 0.0, %v1163
        %v1165 = vpop.f32.mrb[0].mxu0
        %1166 = vdwg.mxu0
        %v1167 = vld [vmem:[%s636] sm:$0xff]
        %v1168 = vld [vmem:[%s636 + $0x8] sm:$0xff]
        %v1169 = vsel %vm750, 1.0, %v1159
        %v1170 = vsel %vm752, 1.0, %v1164
        %v1171 = vmul.f32 %v1167, %v1169
        %v1172 = vmul.f32 %v1168, %v1170
        %v1173 = vsel %vm800, %v1171, -inf
        %v1174 = vsel %vm800, %v1172, -inf
        %v1175 = vmax.f32 %v1173, %v1174
        %v1176 = vrot.slane %v1175, 4
        %v1177 = vmax.f32 %v1175, %v1176
        %v1178 = vrot.slane %v1177, 2
        %v1179 = vmax.f32 %v1177, %v1178
        %v1180 = vrot.slane %v1179, 1
        %v1181 = vmax.f32 %v1179, %v1180
        %v1182 = vmax.f32 %v1181, 1e-20
        %v1183 = vrcp.pop %v1182
        %v1184 = vmul.f32 %v1171, %v1183
        %v1185 = vmul.f32 %v1172, %v1183
        %v1186 = vld [vmem:[#allocation16] sm:$0x3f]
        %v1188 = vsel %vm766, %v754, 0
        %v1191 = vsel %vm766, %v755, 0
        %vm1193 = vcmask 1045504
        %v1195 = vsel %vm1193, %v1186, 0
        %1197 = vmatprep.subr.mxu0 0.0
        %1198 = vmatpush1.msra.mxu0 %v1195
        %1199 = vmatprep.subr.mxu0 0.0
        %1200 = vmatpush1.msra.mxu0 0.0
        %1201 = vmatprep.subr.mxu0 0.0
        %1202 = vmatpush1.msra.mxu0 0.0
        %1203 = vmatprep.subr.mxu0 0.0
        %1204 = vmatpush1.msra.mxu0 0.0
        %1205 = vmatprep.subr.mxu0 0.0
        %1206 = vmatpush1.msra.mxu0 0.0
        %1207 = vmatprep.subr.mxu0 0.0
        %1208 = vmatpush1.msra.mxu0 0.0
        %1209 = vmatprep.subr.mxu0 0.0
        %1210 = vmatpush1.msra.mxu0 0.0
        %1211 = vmatprep.subr.mxu0 0.0
        %1212 = vmatpush1.msra.mxu0 0.0
        %1213 = vmatprep.subr.mxu0 0.0
        %1214 = vmatpush1.msra.mxu0 0.0
        %1215 = vmatprep.subr.mxu0 0.0
        %1216 = vmatpush1.msra.mxu0 0.0
        %1217 = vmatprep.subr.mxu0 0.0
        %1218 = vmatpush1.msra.mxu0 0.0
        %1219 = vmatprep.subr.mxu0 0.0
        %1220 = vmatpush1.msra.mxu0 0.0
        %1221 = vmatprep.subr.mxu0 0.0
        %1222 = vmatpush1.msra.mxu0 0.0
        %1223 = vmatprep.subr.mxu0 0.0
        %1224 = vmatpush1.msra.mxu0 0.0
        %1225 = vmatprep.subr.mxu0 0.0
        %1226 = vmatpush1.msra.mxu0 0.0
        %1227 = vmatprep.subr.mxu0 0.0
        %1228 = vmatpush1.msra.mxu0 0.0
        %1229 = vmatprep.subr.mxu0 0.0
        %1230 = vmatpush1.msra.mxu0 0.0
        %1231 = vmatprep.subr.mxu0 0.0
        %1232 = vmatpush1.msra.mxu0 0.0
        %1233 = vmatprep.subr.mxu0 0.0
        %1234 = vmatpush1.msra.mxu0 0.0
        %1235 = vmatprep.subr.mxu0 0.0
        %1236 = vmatpush1.msra.mxu0 0.0
        %1237 = vmatprep.subr.mxu0 0.0
        %1238 = vmatpush1.msra.mxu0 0.0
        %1239 = vmatprep.subr.mxu0 0.0
        %1240 = vmatpush1.msra.mxu0 0.0
        %1241 = vmatprep.subr.mxu0 0.0
        %1242 = vmatpush1.msra.mxu0 0.0
        %1243 = vmatprep.subr.mxu0 0.0
        %1244 = vmatpush1.msra.mxu0 0.0
        %1245 = vmatprep.subr.mxu0 0.0
        %1246 = vmatpush1.msra.mxu0 0.0
        %1247 = vmatprep.subr.mxu0 0.0
        %1248 = vmatpush1.msra.mxu0 0.0
        %1249 = vmatprep.subr.mxu0 0.0
        %1250 = vmatpush1.msra.mxu0 0.0
        %1251 = vmatprep.subr.mxu0 0.0
        %1252 = vmatpush1.msra.mxu0 0.0
        %1253 = vmatprep.subr.mxu0 0.0
        %1254 = vmatpush1.msra.mxu0 0.0
        %1255 = vmatprep.subr.mxu0 0.0
        %1256 = vmatpush1.msra.mxu0 0.0
        %1257 = vmatprep.subr.mxu0 0.0
        %1258 = vmatpush1.msra.mxu0 0.0
        %1259 = vmatprep.subr.mxu0 0.0
        %1260 = vmatpush1.msra.mxu0 0.0
        %1261 = vmatprep.mubr.f32.mxu0 0.0
        %1262 = vmatmul.mubr.f32.gmra.mrb[0].mxu0 %v1188
        %v1263 = vpop.f32.mrb[0].mxu0
        %v1264 = vadd.f32 0.0, %v1263
        %v1265 = vpop.f32.mrb[0].mxu0
        %1266 = vmatprep.mubr.f32.mxu0 0.0
        %1267 = vmatmul.mubr.f32.gmra.mrb[0].mxu0 %v1191
        %v1268 = vpop.f32.mrb[0].mxu0
        %v1269 = vadd.f32 0.0, %v1268
        %v1270 = vpop.f32.mrb[0].mxu0
        %1271 = vdwg.mxu0
        %v1272 = vld [vmem:[#allocation19] sm:$0x1]
        %v1274 = vlaneseq
        %v1275 = vshrl.u32 %v1274, 7
        %v1276 = vsub.s32 0, %v1275
        %v1277 = vrot.slane %v1272, %v1276
        %v1280 = vsel %vm800, %v1184, 0
        %v1283 = vsel %vm800, %v1185, 0
        %1285 = vmatprep.subr.mxu0 0.0
        %1286 = vmatpush1.msra.mxu0 %v1264
        %1287 = vmatprep.subr.mxu0 0.0
        %1288 = vmatpush1.msra.mxu0 %v1269
        %1289 = vmatprep.subr.mxu0 0.0
        %1290 = vmatpush1.msra.mxu0 0.0
        %1291 = vmatprep.subr.mxu0 0.0
        %1292 = vmatpush1.msra.mxu0 0.0
        %1293 = vmatprep.subr.mxu0 0.0
        %1294 = vmatpush1.msra.mxu0 0.0
        %1295 = vmatprep.subr.mxu0 0.0
        %1296 = vmatpush1.msra.mxu0 0.0
        %1297 = vmatprep.subr.mxu0 0.0
        %1298 = vmatpush1.msra.mxu0 0.0
        %1299 = vmatprep.subr.mxu0 0.0
        %1300 = vmatpush1.msra.mxu0 0.0
        %1301 = vmatprep.subr.mxu0 0.0
        %1302 = vmatpush1.msra.mxu0 0.0
        %1303 = vmatprep.subr.mxu0 0.0
        %1304 = vmatpush1.msra.mxu0 0.0
        %1305 = vmatprep.subr.mxu0 0.0
        %1306 = vmatpush1.msra.mxu0 0.0
        %1307 = vmatprep.subr.mxu0 0.0
        %1308 = vmatpush1.msra.mxu0 0.0
        %1309 = vmatprep.subr.mxu0 0.0
        %1310 = vmatpush1.msra.mxu0 0.0
        %1311 = vmatprep.subr.mxu0 0.0
        %1312 = vmatpush1.msra.mxu0 0.0
        %1313 = vmatprep.subr.mxu0 0.0
        %1314 = vmatpush1.msra.mxu0 0.0
        %1315 = vmatprep.subr.mxu0 0.0
        %1316 = vmatpush1.msra.mxu0 0.0
        %1317 = vmatprep.subr.mxu0 0.0
        %1318 = vmatpush1.msra.mxu0 0.0
        %1319 = vmatprep.subr.mxu0 0.0
        %1320 = vmatpush1.msra.mxu0 0.0
        %1321 = vmatprep.subr.mxu0 0.0
        %1322 = vmatpush1.msra.mxu0 0.0
        %1323 = vmatprep.subr.mxu0 0.0
        %1324 = vmatpush1.msra.mxu0 0.0
        %1325 = vmatprep.subr.mxu0 0.0
        %1326 = vmatpush1.msra.mxu0 0.0
        %1327 = vmatprep.subr.mxu0 0.0
        %1328 = vmatpush1.msra.mxu0 0.0
        %1329 = vmatprep.subr.mxu0 0.0
        %1330 = vmatpush1.msra.mxu0 0.0
        %1331 = vmatprep.subr.mxu0 0.0
        %1332 = vmatpush1.msra.mxu0 0.0
        %1333 = vmatprep.subr.mxu0 0.0
        %1334 = vmatpush1.msra.mxu0 0.0
        %1335 = vmatprep.subr.mxu0 0.0
        %1336 = vmatpush1.msra.mxu0 0.0
        %1337 = vmatprep.subr.mxu0 0.0
        %1338 = vmatpush1.msra.mxu0 0.0
        %1339 = vmatprep.subr.mxu0 0.0
        %1340 = vmatpush1.msra.mxu0 0.0
        %1341 = vmatprep.subr.mxu0 0.0
        %1342 = vmatpush1.msra.mxu0 0.0
        %1343 = vmatprep.subr.mxu0 0.0
        %1344 = vmatpush1.msra.mxu0 0.0
        %1345 = vmatprep.subr.mxu0 0.0
        %1346 = vmatpush1.msra.mxu0 0.0
        %1347 = vmatprep.subr.mxu0 0.0
        %1348 = vmatpush1.msra.mxu0 0.0
        %1349 = vmatprep.mubr.f32.mxu0 0.0
        %1350 = vmatmul.mubr.f32.gmra.mrb[0].mxu0 %v1280
        %v1351 = vpop.f32.mrb[0].mxu0
        %v1352 = vadd.f32 %v1277, %v1351
        %v1353 = vpop.f32.mrb[0].mxu0
        %1354 = vmatprep.mubr.f32.mxu0 0.0
        %1355 = vmatmul.mubr.f32.gmra.mrb[0].mxu0 %v1283
        %v1356 = vpop.f32.mrb[0].mxu0
        %v1357 = vadd.f32 %v1277, %v1356
        %v1358 = vpop.f32.mrb[0].mxu0
        %1359 = vdwg.mxu0
        %v1360 = vmax.f32 %v1352, 0.0
        %v1361 = vmax.f32 %v1357, 0.0
        %v1362 = vld [vmem:[#allocation22] sm:$0x1]
        %v1364 = vlaneseq
        %v1365 = vshrl.u32 %v1364, 7
        %v1366 = vsub.s32 0, %v1365
        %v1367 = vrot.slane %v1362, %v1366
        %v1369 = vmul.f32 %v1360, %v1367
        %v1370 = vmul.f32 %v1361, %v1367
        %1371 = vadd.xlane.f32.xlu0 %v1369
        %v1372 = vpop.xlane.xlu0 %1371
        %1373 = vadd.xlane.f32.xlu0 %v1370
        %v1374 = vpop.xlane.xlu0 %1373
        %v1377 = vlaneseq
        %v1378 = vshrl.u32 %v1377, 7
        %v1379 = vsub.s32 %v749, %v1378
        %v1380 = vrot.slane %v1372, %v1379
        %v1381 = vlaneseq
        %v1382 = vshrl.u32 %v1381, 7
        %v1383 = vsub.s32 %v779, %v1382
        %v1384 = vrot.slane %v1374, %v1383
        %v1385 = vsel %vm784, %v1384, %v1380
        %v1386 = vsel %vm786, %v1385, %v1385
        %v1387 = vsel %vm788, %v1385, %v1386
        %v1388 = vsel %vm790, %v1385, %v1387
        %v1389 = vsel %vm792, %v1385, %v1388
        %v1390 = vsel %vm794, %v1385, %v1389
        %v1391 = vsel %vm796, %v1385, %v1390
        %v1393 = vmul.f32 %v753, %v1391
        %v1395 = vsel %vm800, %v1393, 0
        %1397 = vmatprep.subr.mxu0 0.0
        %1398 = vmatpush1.xpose.msra.mxu0 %v805
        %1399 = vmatprep.subr.mxu0 0.0
        %1400 = vmatpush1.xpose.msra.mxu0 0.0
        %1401 = vmatprep.subr.mxu0 0.0
        %1402 = vmatpush1.xpose.msra.mxu0 0.0
        %1403 = vmatprep.subr.mxu0 0.0
        %1404 = vmatpush1.xpose.msra.mxu0 0.0
        %1405 = vmatprep.subr.mxu0 0.0
        %1406 = vmatpush1.xpose.msra.mxu0 0.0
        %1407 = vmatprep.subr.mxu0 0.0
        %1408 = vmatpush1.xpose.msra.mxu0 0.0
        %1409 = vmatprep.subr.mxu0 0.0
        %1410 = vmatpush1.xpose.msra.mxu0 0.0
        %1411 = vmatprep.subr.mxu0 0.0
        %1412 = vmatpush1.xpose.msra.mxu0 0.0
        %1413 = vmatprep.subr.mxu0 0.0
        %1414 = vmatpush1.xpose.msra.mxu0 0.0
        %1415 = vmatprep.subr.mxu0 0.0
        %1416 = vmatpush1.xpose.msra.mxu0 0.0
        %1417 = vmatprep.subr.mxu0 0.0
        %1418 = vmatpush1.xpose.msra.mxu0 0.0
        %1419 = vmatprep.subr.mxu0 0.0
        %1420 = vmatpush1.xpose.msra.mxu0 0.0
        %1421 = vmatprep.subr.mxu0 0.0
        %1422 = vmatpush1.xpose.msra.mxu0 0.0
        %1423 = vmatprep.subr.mxu0 0.0
        %1424 = vmatpush1.xpose.msra.mxu0 0.0
        %1425 = vmatprep.subr.mxu0 0.0
        %1426 = vmatpush1.xpose.msra.mxu0 0.0
        %1427 = vmatprep.subr.mxu0 0.0
        %1428 = vmatpush1.xpose.msra.mxu0 0.0
        %1429 = vmatprep.subr.mxu0 0.0
        %1430 = vmatpush1.xpose.msra.mxu0 0.0
        %1431 = vmatprep.subr.mxu0 0.0
        %1432 = vmatpush1.xpose.msra.mxu0 0.0
        %1433 = vmatprep.subr.mxu0 0.0
        %1434 = vmatpush1.xpose.msra.mxu0 0.0
        %1435 = vmatprep.subr.mxu0 0.0
        %1436 = vmatpush1.xpose.msra.mxu0 0.0
        %1437 = vmatprep.subr.mxu0 0.0
        %1438 = vmatpush1.xpose.msra.mxu0 0.0
        %1439 = vmatprep.subr.mxu0 0.0
        %1440 = vmatpush1.xpose.msra.mxu0 0.0
        %1441 = vmatprep.subr.mxu0 0.0
        %1442 = vmatpush1.xpose.msra.mxu0 0.0
        %1443 = vmatprep.subr.mxu0 0.0
        %1444 = vmatpush1.xpose.msra.mxu0 0.0
        %1445 = vmatprep.subr.mxu0 0.0
        %1446 = vmatpush1.xpose.msra.mxu0 0.0
        %1447 = vmatprep.subr.mxu0 0.0
        %1448 = vmatpush1.xpose.msra.mxu0 0.0
        %1449 = vmatprep.subr.mxu0 0.0
        %1450 = vmatpush1.xpose.msra.mxu0 0.0
        %1451 = vmatprep.subr.mxu0 0.0
        %1452 = vmatpush1.xpose.msra.mxu0 0.0
        %1453 = vmatprep.subr.mxu0 0.0
        %1454 = vmatpush1.xpose.msra.mxu0 0.0
        %1455 = vmatprep.subr.mxu0 0.0
        %1456 = vmatpush1.xpose.msra.mxu0 0.0
        %1457 = vmatprep.subr.mxu0 0.0
        %1458 = vmatpush1.xpose.msra.mxu0 0.0
        %1459 = vmatprep.subr.mxu0 0.0
        %1460 = vmatpush1.xpose.msra.mxu0 0.0
        %1461 = vmatprep.mubr.f32.mxu0 0.0
        %1462 = vmatmul.mubr.f32.gmra.mrb[0].mxu0 %v1395
        %v1463 = vpop.f32.mrb[0].mxu0
        %v1464 = vadd.f32 0.0, %v1463
        %v1465 = vpop.f32.mrb[0].mxu0
        %1466 = vdwg.mxu0
        %v1467 = vsel %vm750, 1.0, %v1464
        %v1468 = vmul.f32 %v756, %v1467
        %v1469 = vld [vmem:[#allocation20] sm:$0xff]
        %v1470 = vld [vmem:[#allocation20 + $0x8] sm:$0xff]
        %v1471 = vld [vmem:[#allocation20 + $0x10] sm:$0xff]
        %v1472 = vld [vmem:[#allocation20 + $0x18] sm:$0xff]
        %v1474 = vsel %vm1049, %v1040, 0
        %1476 = vmatprep.subr.mxu0 0.0
        %1477 = vmatpush1.msra.mxu0 %v1469
        %1478 = vmatprep.subr.mxu0 0.0
        %1479 = vmatpush1.msra.mxu0 %v1470
        %1480 = vmatprep.subr.mxu0 0.0
        %1481 = vmatpush1.msra.mxu0 %v1471
        %1482 = vmatprep.subr.mxu0 0.0
        %1483 = vmatpush1.msra.mxu0 %v1472
        %1484 = vmatprep.subr.mxu0 0.0
        %1485 = vmatpush1.msra.mxu0 0.0
        %1486 = vmatprep.subr.mxu0 0.0
        %1487 = vmatpush1.msra.mxu0 0.0
        %1488 = vmatprep.subr.mxu0 0.0
        %1489 = vmatpush1.msra.mxu0 0.0
        %1490 = vmatprep.subr.mxu0 0.0
        %1491 = vmatpush1.msra.mxu0 0.0
        %1492 = vmatprep.subr.mxu0 0.0
        %1493 = vmatpush1.msra.mxu0 0.0
        %1494 = vmatprep.subr.mxu0 0.0
        %1495 = vmatpush1.msra.mxu0 0.0
        %1496 = vmatprep.subr.mxu0 0.0
        %1497 = vmatpush1.msra.mxu0 0.0
        %1498 = vmatprep.subr.mxu0 0.0
        %1499 = vmatpush1.msra.mxu0 0.0
        %1500 = vmatprep.subr.mxu0 0.0
        %1501 = vmatpush1.msra.mxu0 0.0
        %1502 = vmatprep.subr.mxu0 0.0
        %1503 = vmatpush1.msra.mxu0 0.0
        %1504 = vmatprep.subr.mxu0 0.0
        %1505 = vmatpush1.msra.mxu0 0.0
        %1506 = vmatprep.subr.mxu0 0.0
        %1507 = vmatpush1.msra.mxu0 0.0
        %1508 = vmatprep.subr.mxu0 0.0
        %1509 = vmatpush1.msra.mxu0 0.0
        %1510 = vmatprep.subr.mxu0 0.0
        %1511 = vmatpush1.msra.mxu0 0.0
        %1512 = vmatprep.subr.mxu0 0.0
        %1513 = vmatpush1.msra.mxu0 0.0
        %1514 = vmatprep.subr.mxu0 0.0
        %1515 = vmatpush1.msra.mxu0 0.0
        %1516 = vmatprep.subr.mxu0 0.0
        %1517 = vmatpush1.msra.mxu0 0.0
        %1518 = vmatprep.subr.mxu0 0.0
        %1519 = vmatpush1.msra.mxu0 0.0
        %1520 = vmatprep.subr.mxu0 0.0
        %1521 = vmatpush1.msra.mxu0 0.0
        %1522 = vmatprep.subr.mxu0 0.0
        %1523 = vmatpush1.msra.mxu0 0.0
        %1524 = vmatprep.subr.mxu0 0.0
        %1525 = vmatpush1.msra.mxu0 0.0
        %1526 = vmatprep.subr.mxu0 0.0
        %1527 = vmatpush1.msra.mxu0 0.0
        %1528 = vmatprep.subr.mxu0 0.0
        %1529 = vmatpush1.msra.mxu0 0.0
        %1530 = vmatprep.subr.mxu0 0.0
        %1531 = vmatpush1.msra.mxu0 0.0
        %1532 = vmatprep.subr.mxu0 0.0
        %1533 = vmatpush1.msra.mxu0 0.0
        %1534 = vmatprep.subr.mxu0 0.0
        %1535 = vmatpush1.msra.mxu0 0.0
        %1536 = vmatprep.subr.mxu0 0.0
        %1537 = vmatpush1.msra.mxu0 0.0
        %1538 = vmatprep.subr.mxu0 0.0
        %1539 = vmatpush1.msra.mxu0 0.0
        %1540 = vmatprep.mubr.f32.mxu0 0.0
        %1541 = vmatmul.mubr.f32.gmra.mrb[0].mxu0 %v1474
        %v1542 = vpop.f32.mrb[0].mxu0
        %v1543 = vadd.f32 0.0, %v1542
        %v1544 = vpop.f32.mrb[0].mxu0
        %1545 = vdwg.mxu0
        %v1546 = vld [vmem:[#allocation23] sm:$0x1]
        %v1548 = vlaneseq
        %v1549 = vshrl.u32 %v1548, 7
        %v1550 = vsub.s32 0, %v1549
        %v1551 = vrot.slane %v1546, %v1550
        %v1554 = vsel %vm966, %v1468, 0
        %1556 = vmatprep.subr.mxu0 0.0
        %1557 = vmatpush1.msra.mxu0 %v1543
        %1558 = vmatprep.subr.mxu0 0.0
        %1559 = vmatpush1.msra.mxu0 0.0
        %1560 = vmatprep.subr.mxu0 0.0
        %1561 = vmatpush1.msra.mxu0 0.0
        %1562 = vmatprep.subr.mxu0 0.0
        %1563 = vmatpush1.msra.mxu0 0.0
        %1564 = vmatprep.subr.mxu0 0.0
        %1565 = vmatpush1.msra.mxu0 0.0
        %1566 = vmatprep.subr.mxu0 0.0
        %1567 = vmatpush1.msra.mxu0 0.0
        %1568 = vmatprep.subr.mxu0 0.0
        %1569 = vmatpush1.msra.mxu0 0.0
        %1570 = vmatprep.subr.mxu0 0.0
        %1571 = vmatpush1.msra.mxu0 0.0
        %1572 = vmatprep.subr.mxu0 0.0
        %1573 = vmatpush1.msra.mxu0 0.0
        %1574 = vmatprep.subr.mxu0 0.0
        %1575 = vmatpush1.msra.mxu0 0.0
        %1576 = vmatprep.subr.mxu0 0.0
        %1577 = vmatpush1.msra.mxu0 0.0
        %1578 = vmatprep.subr.mxu0 0.0
        %1579 = vmatpush1.msra.mxu0 0.0
        %1580 = vmatprep.subr.mxu0 0.0
        %1581 = vmatpush1.msra.mxu0 0.0
        %1582 = vmatprep.subr.mxu0 0.0
        %1583 = vmatpush1.msra.mxu0 0.0
        %1584 = vmatprep.subr.mxu0 0.0
        %1585 = vmatpush1.msra.mxu0 0.0
        %1586 = vmatprep.subr.mxu0 0.0
        %1587 = vmatpush1.msra.mxu0 0.0
        %1588 = vmatprep.subr.mxu0 0.0
        %1589 = vmatpush1.msra.mxu0 0.0
        %1590 = vmatprep.subr.mxu0 0.0
        %1591 = vmatpush1.msra.mxu0 0.0
        %1592 = vmatprep.subr.mxu0 0.0
        %1593 = vmatpush1.msra.mxu0 0.0
        %1594 = vmatprep.subr.mxu0 0.0
        %1595 = vmatpush1.msra.mxu0 0.0
        %1596 = vmatprep.subr.mxu0 0.0
        %1597 = vmatpush1.msra.mxu0 0.0
        %1598 = vmatprep.subr.mxu0 0.0
        %1599 = vmatpush1.msra.mxu0 0.0
        %1600 = vmatprep.subr.mxu0 0.0
        %1601 = vmatpush1.msra.mxu0 0.0
        %1602 = vmatprep.subr.mxu0 0.0
        %1603 = vmatpush1.msra.mxu0 0.0
        %1604 = vmatprep.subr.mxu0 0.0
        %1605 = vmatpush1.msra.mxu0 0.0
        %1606 = vmatprep.subr.mxu0 0.0
        %1607 = vmatpush1.msra.mxu0 0.0
        %1608 = vmatprep.subr.mxu0 0.0
        %1609 = vmatpush1.msra.mxu0 0.0
        %1610 = vmatprep.subr.mxu0 0.0
        %1611 = vmatpush1.msra.mxu0 0.0
        %1612 = vmatprep.subr.mxu0 0.0
        %1613 = vmatpush1.msra.mxu0 0.0
        %1614 = vmatprep.subr.mxu0 0.0
        %1615 = vmatpush1.msra.mxu0 0.0
        %1616 = vmatprep.subr.mxu0 0.0
        %1617 = vmatpush1.msra.mxu0 0.0
        %1618 = vmatprep.subr.mxu0 0.0
        %1619 = vmatpush1.msra.mxu0 0.0
        %1620 = vmatprep.mubr.f32.mxu0 0.0
        %1621 = vmatmul.mubr.f32.gmra.mrb[0].mxu0 %v1554
        %v1622 = vpop.f32.mrb[0].mxu0
        %v1623 = vadd.f32 %v1551, %v1622
        %v1624 = vpop.f32.mrb[0].mxu0
        %1625 = vdwg.mxu0
        %1626 = vst [vmem:[%s745] sm:$0xff] %v1623
        %s1627 = sand.u32 %s369, 1
        %s1628 = scalar_lea.sflag [#allocation4], %s1627
        %s1629 = sand.u32 %s369, 1
        %s1630 = smul.addr %s1629, 8
        %s1631 = scalar_lea.vmem [#allocation25], %s1630
        // Predicated region
        $region133: #{pattern_graph_conv2d_forward.1} parent=75 // pred_check
          %p1632 = pneg %p379
        $region134: #{pattern_graph_conv2d_forward.1} parent=75 // pred_check_branch
          %1634 = sbr.rel (%p1632) target = $region136
        $region135: #{pattern_graph_conv2d_forward.1} parent=75 // pred_region
          %s1636 = ssub.s32 128, 128
          %1637 = vsyncadd %s1628, %s1636
          %s1638 = smul.addr %s42, 128
          %s1639 = scalar_lea.hbm %s14, %s1638
          %s1641 = sshll.u32 %s1631, 4
          %s1642 = int_to_ptr.vmem [resolvable:$true] %s1641
          %1644 = dma.vmem_to_hbm [thread:$0]  %s1642, 128, %s1639, %s1628
        $region136: #{pattern_graph_conv2d_forward.1} parent=75 // pred_fallthru
          _
      $region76: #{pattern_graph_conv2d_forward.1} parent=5 // pred_fallthru
        _
      %p1645 = scmp.le.s32.totalorder 2, %s37
      // Predicated region
      $region137: #{pattern_graph_conv2d_forward.1} parent=5 // pred_check
        %p1646 = pneg %p1645
      $region138: #{pattern_graph_conv2d_forward.1} parent=5 // pred_check_branch
        %1648 = sbr.rel (%p1646) target = $region140
      $region139: #{pattern_graph_conv2d_forward.1} parent=5 // pred_region
        %s1649 = ssub.s32 %s37, 2
        // Predicated region
        $region141: #{pattern_graph_conv2d_forward.1} parent=139 // pred_check
          %p1650 = pneg %p385
        $region142: #{pattern_graph_conv2d_forward.1} parent=139 // pred_check_branch
          %1652 = sbr.rel (%p1650) target = $region144
        $region143: #{pattern_graph_conv2d_forward.1} parent=139 // pred_region
          %s1653 = sand.u32 %s370, 1
          %s1654 = scalar_lea.sflag [#allocation4], %s1653
          %s1655 = sand.u32 %s370, 1
          %s1656 = smul.addr %s1655, 8
          %s1657 = scalar_lea.vmem [#allocation25], %s1656
          %1658 = dma.done %s1654, 128
        $region144: #{pattern_graph_conv2d_forward.1} parent=139 // pred_fallthru
          _
      $region140: #{pattern_graph_conv2d_forward.1} parent=5 // pred_fallthru
        _
    $region6: #{pattern_graph_conv2d_forward.1} parent=1 // loop_footer
      %s41 = sadd.s32 1, %s37
    $region7: #{pattern_graph_conv2d_forward.1} parent=1 // loop_footer_branch
      %36 = sbr.rel target = $region3
    $region8: #{pattern_graph_conv2d_forward.1} parent=1 // loop_exit
      _
    %1659 = vsyncpa [#allocation3], 1
    %s1660 = scalar_lea.sflag [#allocation3], 1
    %1661 = vsyncpa %s1660, 1
    %1662 = vsyncpa [#allocation6], 1
    %s1663 = scalar_lea.sflag [#allocation6], 1
    %1664 = vsyncpa %s1663, 1
    %1665 = vsyncpa [#allocation9], 1
    %s1666 = scalar_lea.sflag [#allocation9], 1
    %1667 = vsyncpa %s1666, 1
    %1668 = vsyncpa [#allocation12], 1
    %1669 = vsyncpa [#allocation15], 1
    %1670 = vsyncpa [#allocation18], 1
    %1671 = vsyncpa [#allocation21], 1
    %1672 = vsyncpa [#allocation24], 1
    %1673 = vsyncpa [#allocation4], 1
    %s1674 = scalar_lea.sflag [#allocation4], 1
    %1675 = vsyncpa %s1674, 1

</llo_original>
